<compile_context>
chip_gen: v7x
topology: tpu7x:2x2x1
jax: 0.10.0
libtpu: 0.0.40
codegen_flags: <defaults>
</compile_context>

<pallas_src>
import math

import jax
import jax.numpy as jnp
from jax import lax
from jax.experimental import pallas as pl
from jax.experimental.pallas import tpu as pltpu

# ----------------------------------------------------------------------------
# Small synthetic Whisper config
# ----------------------------------------------------------------------------
B = 2          # batch
T = 8          # decoder sequence length
S = 16         # encoder sequence length
D = 32         # d_model (embed_dim)
H = 4          # decoder_attention_heads
HD = D // H    # head_dim
F = 64         # decoder_ffn_dim
EPS = 1e-5     # nn.LayerNorm default eps
NEG = -1e30

# Weight slab layout: 7 segments, each 128-lane aligned (slices never cross a
# (8,128) tile boundary inside the kernel).
W_SEG = 128
C_QKV1 = 0 * W_SEG   # (D, 3D)  [wq*scale | wk | wv]
C_WO1  = 1 * W_SEG   # (D, D)
C_Q2   = 2 * W_SEG   # (D, D)   wq2*scale
C_KV2  = 3 * W_SEG   # (D, 2D)  [wk2 | wv2]
C_WO2  = 4 * W_SEG   # (D, D)
C_FC1  = 5 * W_SEG   # (D, F)
C_FC2T = 6 * W_SEG   # (D, F)   fc2 weight transposed (contract on dim 1)
W_COLS = 7 * W_SEG

# Bias/LN slab rows (each padded to 128 lanes).
R_LN1G, R_LN1B, R_LN2G, R_LN2B, R_LN3G, R_LN3B = 0, 1, 2, 3, 4, 5
R_BQKV1, R_BO1, R_BQ2, R_BKV2, R_BO2, R_BFC1, R_BFC2 = 6, 7, 8, 9, 10, 11, 12
B_ROWS = 13

OUT_PAD = 128   # lane-dense output width (sliced back to D in the wrapper)


# ----------------------------------------------------------------------------
# In-kernel helpers (traced inside the Pallas kernel body)
# ----------------------------------------------------------------------------
def _layernorm(x, g, b):
    mu = jnp.mean(x, axis=-1, keepdims=True)
    xc = x - mu
    var = jnp.mean(xc * xc, axis=-1, keepdims=True)
    return xc * lax.rsqrt(var + EPS) * g + b


def _gelu_exact(x):
    # ACT2FN["gelu"] in HF is the exact erf-based GELU.
    return 0.5 * x * (1.0 + lax.erf(x * (1.0 / math.sqrt(2.0))))


_DN_T = (((1,), (1,)), ((), ()))   # contract dim 1 of both operands (a @ b.T)


def _mha(q_src, q_off, kv_src, k_off, v_off, wo, bias):
    """Multi-head attention over pre-projected, pre-scaled q/k/v slabs.

    q/k/v per head are sliced straight from the projection outputs (no
    intermediate full-width q/k/v values).  Scores use a transpose-free
    dot_general; softmax keeps p unnormalized and rescales the (tq, HD)
    context with an EUP reciprocal.  Per-head contexts are concatenated and
    projected through wo with a single matmul.
    """
    ctxs = []
    for hh in range(H):
        lo = hh * HD
        qh = q_src[:, q_off + lo:q_off + lo + HD]
        kh = kv_src[:, k_off + lo:k_off + lo + HD]
        vh = kv_src[:, v_off + lo:v_off + lo + HD]
        s = lax.dot_general(qh, kh, _DN_T, preferred_element_type=jnp.float32)
        if bias is not None:
            s = s + bias
        p = jnp.exp(s - jnp.max(s, axis=-1, keepdims=True))
        l = jnp.sum(p, axis=-1, keepdims=True)
        ctx = jnp.dot(p, vh, preferred_element_type=jnp.float32)        # (tq, HD)
        ctxs.append(ctx * pl.reciprocal(l, approx=False))
    ctx_all = jnp.concatenate(ctxs, axis=1)                             # (tq, D)
    return jnp.dot(ctx_all, wo, preferred_element_type=jnp.float32)     # (tq, D)


# ----------------------------------------------------------------------------
# Pallas kernel: entire layer, one batch element per grid step
# ----------------------------------------------------------------------------
def decoder_layer_kernel(hs_ref, enc_ref, w_ref, b_ref, out_ref):
    x = hs_ref[0]              # (T, D)
    enc = enc_ref[0]           # (S, D)

    # --- self attention block (causal) + residual; dropout == identity ---
    h1 = _layernorm(x, b_ref[R_LN1G:R_LN1G + 1, 0:D], b_ref[R_LN1B:R_LN1B + 1, 0:D])
    qkv = jnp.dot(h1, w_ref[:, C_QKV1:C_QKV1 + 3 * D],
                  preferred_element_type=jnp.float32) + b_ref[R_BQKV1:R_BQKV1 + 1, 0:3 * D]

    # causal mask built in-kernel (VPU iota/compare, no HBM mask traffic)
    ri = lax.broadcasted_iota(jnp.int32, (T, T), 0)
    ci = lax.broadcasted_iota(jnp.int32, (T, T), 1)
    causal = jnp.where(ri >= ci, 0.0, NEG)

    attn1 = _mha(qkv, 0, qkv, D, 2 * D, w_ref[:, C_WO1:C_WO1 + D], causal)
    x = x + attn1 + b_ref[R_BO1:R_BO1 + 1, 0:D]

    # --- cross attention block (keys/values from encoder) + residual ---
    h2 = _layernorm(x, b_ref[R_LN2G:R_LN2G + 1, 0:D], b_ref[R_LN2B:R_LN2B + 1, 0:D])
    q2 = jnp.dot(h2, w_ref[:, C_Q2:C_Q2 + D],
                 preferred_element_type=jnp.float32) + b_ref[R_BQ2:R_BQ2 + 1, 0:D]
    kv2 = jnp.dot(enc, w_ref[:, C_KV2:C_KV2 + 2 * D],
                  preferred_element_type=jnp.float32) + b_ref[R_BKV2:R_BKV2 + 1, 0:2 * D]
    attn2 = _mha(q2, 0, kv2, 0, D, w_ref[:, C_WO2:C_WO2 + D], None)
    x = x + attn2 + b_ref[R_BO2:R_BO2 + 1, 0:D]

    # --- MLP block + residual ---
    h3 = _layernorm(x, b_ref[R_LN3G:R_LN3G + 1, 0:D], b_ref[R_LN3B:R_LN3B + 1, 0:D])
    f = jnp.dot(h3, w_ref[:, C_FC1:C_FC1 + F],
                preferred_element_type=jnp.float32) + b_ref[R_BFC1:R_BFC1 + 1, 0:F]
    f = _gelu_exact(f)
    y = lax.dot_general(f, w_ref[:, C_FC2T:C_FC2T + F], _DN_T,
                        preferred_element_type=jnp.float32) + b_ref[R_BFC2:R_BFC2 + 1, 0:D]
    x = x + y

    # Lane-dense store: pad D=32 -> 128 lanes so the store is an unmasked vst.
    out_ref[0] = jnp.concatenate(
        [x, jnp.zeros((T, OUT_PAD - D), jnp.float32)], axis=1)
    # TODO(synk): attention-weight outputs / present_key_value (KV cache) are
    # not materialized here; only the hidden_states output is produced.


# ----------------------------------------------------------------------------
# One-time parameter packing (param-load time, NOT in the per-call path)
# ----------------------------------------------------------------------------
def pack_params(p):
    scale = HD ** -0.5
    zeros_d = jnp.zeros((1, D), jnp.float32)

    def seg(w):   # pad a (D, c<=128) segment to (D, 128)
        c = w.shape[1]
        if c == W_SEG:
            return w
        return jnp.concatenate([w, jnp.zeros((D, W_SEG - c), jnp.float32)], axis=1)

    def row(v):   # pad a (1, c<=128) row to (1, 128)
        c = v.shape[1]
        if c == 128:
            return v
        return jnp.concatenate([v, jnp.zeros((1, 128 - c), jnp.float32)], axis=1)

    w_qkv1 = jnp.concatenate([p["wq1"] * scale, p["wk1"], p["wv1"]], axis=1)   # (D, 3D)
    w_kv2 = jnp.concatenate([p["wk2"], p["wv2"]], axis=1)                      # (D, 2D)
    w_slab = jnp.concatenate(
        [seg(w_qkv1), seg(p["wo1"]), seg(p["wq2"] * scale), seg(w_kv2),
         seg(p["wo2"]), seg(p["w_fc1"]), seg(p["w_fc2"].T)], axis=1)           # (D, 896)

    b_qkv1 = jnp.concatenate([p["bq1"] * scale, zeros_d, p["bv1"]], axis=1)    # (1, 3D)
    b_kv2 = jnp.concatenate([zeros_d, p["bv2"]], axis=1)                       # (1, 2D)
    rows = [p["ln1_g"], p["ln1_b"], p["ln2_g"], p["ln2_b"], p["ln3_g"], p["ln3_b"],
            b_qkv1, p["bo1"], p["bq2"] * scale, b_kv2, p["bo2"], p["b_fc1"], p["b_fc2"]]
    b_slab = jnp.concatenate([row(r) for r in rows], axis=0)                   # (13, 128)
    return w_slab, b_slab


# ----------------------------------------------------------------------------
# Per-call wrapper: no packing, no mask building — just the pallas_call
# ----------------------------------------------------------------------------
@jax.jit
def whisper_decoder_layer(hidden_states, encoder_hidden_states, w_slab, b_slab):
    out = pl.pallas_call(
        decoder_layer_kernel,
        out_shape=jax.ShapeDtypeStruct((B, T, OUT_PAD), jnp.float32),
        grid=(B,),
        in_specs=[
            pl.BlockSpec((1, T, D), lambda b: (b, 0, 0)),
            pl.BlockSpec((1, S, D), lambda b: (b, 0, 0)),
            pl.BlockSpec((D, W_COLS), lambda b: (0, 0)),     # resident across grid
            pl.BlockSpec((B_ROWS, 128), lambda b: (0, 0)),   # resident across grid
        ],
        out_specs=pl.BlockSpec((1, T, OUT_PAD), lambda b: (b, 0, 0)),
        compiler_params=pltpu.CompilerParams(
            dimension_semantics=("parallel",)),
    )(hidden_states, encoder_hidden_states, w_slab, b_slab)
    return out[:, :, :D]


# ----------------------------------------------------------------------------
# Pure-JAX reference (unfused, per-batch attention) for a sanity check
# ----------------------------------------------------------------------------
def reference(hidden_states, encoder_hidden_states, p):
    def ln(x, g, b):
        mu = jnp.mean(x, -1, keepdims=True)
        var = jnp.mean((x - mu) ** 2, -1, keepdims=True)
        return (x - mu) * lax.rsqrt(var + EPS) * g + b

    def mha(xq, xkv, wq, bq, wk, wv, bv, wo, bo, causal):
        scale = HD ** -0.5
        q = (xq @ wq + bq) * scale
        k = xkv @ wk
        v = xkv @ wv + bv
        Bq, tq, _ = q.shape
        tk = k.shape[1]
        q = q.reshape(Bq, tq, H, HD).transpose(0, 2, 1, 3)
        k = k.reshape(Bq, tk, H, HD).transpose(0, 2, 1, 3)
        v = v.reshape(Bq, tk, H, HD).transpose(0, 2, 1, 3)
        s = jnp.einsum("bhqd,bhkd->bhqk", q, k)
        if causal:
            ri = lax.broadcasted_iota(jnp.int32, (tq, tk), 0)
            ci = lax.broadcasted_iota(jnp.int32, (tq, tk), 1)
            s = jnp.where(ri >= ci, s, NEG)
        a = jax.nn.softmax(s, axis=-1)
        o = jnp.einsum("bhqk,bhkd->bhqd", a, v)
        o = o.transpose(0, 2, 1, 3).reshape(Bq, tq, D)
        return o @ wo + bo

    x = hidden_states
    h = ln(x, p["ln1_g"][0], p["ln1_b"][0])
    x = x + mha(h, h, p["wq1"], p["bq1"][0], p["wk1"], p["wv1"], p["bv1"][0],
                p["wo1"], p["bo1"][0], True)
    h = ln(x, p["ln2_g"][0], p["ln2_b"][0])
    x = x + mha(h, encoder_hidden_states, p["wq2"], p["bq2"][0], p["wk2"],
                p["wv2"], p["bv2"][0], p["wo2"], p["bo2"][0], False)
    h = ln(x, p["ln3_g"][0], p["ln3_b"][0])
    f = h @ p["w_fc1"] + p["b_fc1"][0]
    f = 0.5 * f * (1.0 + lax.erf(f / math.sqrt(2.0)))
    f = f @ p["w_fc2"] + p["b_fc2"][0]
    return x + f


# ----------------------------------------------------------------------------
# Deterministic parameter init + driver
# ----------------------------------------------------------------------------
def make_params(key):
    keys = jax.random.split(key, 30)
    k = iter(keys)
    n = lambda shape, kk: 0.02 * jax.random.normal(kk, shape, jnp.float32)
    p = {}
    p["ln1_g"] = 1.0 + n((1, D), next(k)); p["ln1_b"] = n((1, D), next(k))
    p["wq1"] = n((D, D), next(k)); p["bq1"] = n((1, D), next(k))
    p["wk1"] = n((D, D), next(k))                       # k_proj: no bias
    p["wv1"] = n((D, D), next(k)); p["bv1"] = n((1, D), next(k))
    p["wo1"] = n((D, D), next(k)); p["bo1"] = n((1, D), next(k))
    p["ln2_g"] = 1.0 + n((1, D), next(k)); p["ln2_b"] = n((1, D), next(k))
    p["wq2"] = n((D, D), next(k)); p["bq2"] = n((1, D), next(k))
    p["wk2"] = n((D, D), next(k))
    p["wv2"] = n((D, D), next(k)); p["bv2"] = n((1, D), next(k))
    p["wo2"] = n((D, D), next(k)); p["bo2"] = n((1, D), next(k))
    p["ln3_g"] = 1.0 + n((1, D), next(k)); p["ln3_b"] = n((1, D), next(k))
    p["w_fc1"] = n((D, F), next(k)); p["b_fc1"] = n((1, F), next(k))
    p["w_fc2"] = n((F, D), next(k)); p["b_fc2"] = n((1, D), next(k))
    return p


if __name__ == "__main__":
    root = jax.random.PRNGKey(0)
    k_h, k_e, k_p = jax.random.split(root, 3)

    hidden_states = jax.random.normal(k_h, (B, T, D), jnp.float32)
    encoder_hidden_states = jax.random.normal(k_e, (B, S, D), jnp.float32)
    params = make_params(k_p)

    # Pack parameters ONCE (param-load time); per-call path gets the slabs.
    w_slab, b_slab = jax.block_until_ready(pack_params(params))

    out = whisper_decoder_layer(hidden_states, encoder_hidden_states, w_slab, b_slab)
    out = jax.block_until_ready(out)

    ref = reference(hidden_states, encoder_hidden_states, params)
    assert out.shape == (B, T, D)
    assert jnp.allclose(out, ref, atol=1e-4, rtol=1e-4), "mismatch vs reference"

    print("KERNEL_OK")
</pallas_src>

<mosaic_0001>
module attributes {stable_mosaic.version = 11 : i64} {
  func.func @decoder_layer_kernel(%arg0: i32, %arg1: memref<1x8x32xf32, #tpu.memory_space<vmem>>, %arg2: memref<1x16x32xf32, #tpu.memory_space<vmem>>, %arg3: memref<32x896xf32, #tpu.memory_space<vmem>>, %arg4: memref<13x128xf32, #tpu.memory_space<vmem>>, %arg5: memref<1x8x128xf32, #tpu.memory_space<vmem>>) attributes {dimension_semantics = [#tpu.dimension_semantics<parallel>], iteration_bounds = array<i64: 2>, scalar_prefetch = 0 : i64, scratch_operands = 0 : i64, tpu.core_type = #tpu.core_type<tc>, window_params = [{transform_indices = @transform_0, window_bounds = array<i64: 1, 8, 32>}, {transform_indices = @transform_1, window_bounds = array<i64: 1, 16, 32>}, {pipeline_mode = #tpu.pipeline_mode<synchronous>, transform_indices = @transform_2, window_bounds = array<i64: 32, 896>}, {pipeline_mode = #tpu.pipeline_mode<synchronous>, transform_indices = @transform_3, window_bounds = array<i64: 13, 128>}, {transform_indices = @transform_4, window_bounds = array<i64: 1, 8, 128>}]} {
    %c0 = arith.constant 0 : index
    %c0_0 = arith.constant 0 : index
    %c0_1 = arith.constant 0 : index
    %0 = vector.load %arg1[%c0, %c0_0, %c0_1] : memref<1x8x32xf32, #tpu.memory_space<vmem>>, vector<1x8x32xf32>
    %1 = vector.shape_cast %0 : vector<1x8x32xf32> to vector<8x32xf32>
    %c0_2 = arith.constant 0 : index
    %c0_3 = arith.constant 0 : index
    %c0_4 = arith.constant 0 : index
    %2 = vector.load %arg2[%c0_2, %c0_3, %c0_4] : memref<1x16x32xf32, #tpu.memory_space<vmem>>, vector<1x16x32xf32>
    %3 = vector.shape_cast %2 : vector<1x16x32xf32> to vector<16x32xf32>
    %c0_5 = arith.constant 0 : index
    %c0_6 = arith.constant 0 : index
    %4 = vector.load %arg4[%c0_5, %c0_6] : memref<13x128xf32, #tpu.memory_space<vmem>>, vector<1x32xf32>
    %c1 = arith.constant 1 : index
    %c0_7 = arith.constant 0 : index
    %5 = vector.load %arg4[%c1, %c0_7] : memref<13x128xf32, #tpu.memory_space<vmem>>, vector<1x32xf32>
    %cst = arith.constant dense<0.000000e+00> : vector<8xf32>
    %6 = vector.multi_reduction <add>, %1, %cst [1] : vector<8x32xf32> to vector<8xf32>
    %7 = vector.shape_cast %6 : vector<8xf32> to vector<8x1xf32>
    %cst_8 = arith.constant 3.200000e+01 : f32
    %8 = vector.broadcast %cst_8 : f32 to vector<8x1xf32>
    %9 = arith.divf %7, %8 : vector<8x1xf32>
    %10 = vector.broadcast %9 : vector<8x1xf32> to vector<8x32xf32>
    %11 = arith.subf %1, %10 : vector<8x32xf32>
    %12 = arith.mulf %11, %11 : vector<8x32xf32>
    %cst_9 = arith.constant dense<0.000000e+00> : vector<8xf32>
    %13 = vector.multi_reduction <add>, %12, %cst_9 [1] : vector<8x32xf32> to vector<8xf32>
    %14 = vector.shape_cast %13 : vector<8xf32> to vector<8x1xf32>
    %cst_10 = arith.constant 3.200000e+01 : f32
    %15 = vector.broadcast %cst_10 : f32 to vector<8x1xf32>
    %16 = arith.divf %14, %15 : vector<8x1xf32>
    %cst_11 = arith.constant 9.99999974E-6 : f32
    %17 = vector.broadcast %cst_11 : f32 to vector<8x1xf32>
    %18 = arith.addf %16, %17 : vector<8x1xf32>
    %19 = math.rsqrt %18 : vector<8x1xf32>
    %20 = vector.broadcast %19 : vector<8x1xf32> to vector<8x32xf32>
    %21 = arith.mulf %11, %20 : vector<8x32xf32>
    %22 = vector.broadcast %4 : vector<1x32xf32> to vector<8x32xf32>
    %23 = arith.mulf %21, %22 : vector<8x32xf32>
    %24 = vector.broadcast %5 : vector<1x32xf32> to vector<8x32xf32>
    %25 = arith.addf %23, %24 : vector<8x32xf32>
    %c0_12 = arith.constant 0 : index
    %c0_13 = arith.constant 0 : index
    %26 = vector.load %arg3[%c0_12, %c0_13] : memref<32x896xf32, #tpu.memory_space<vmem>>, vector<32x96xf32>
    %cst_14 = arith.constant dense<0.000000e+00> : vector<8x96xf32>
    %27 = tpu.matmul %25, %26, %cst_14 {dimension_numbers = #tpu.dot_dimension_numbers<[1], [0], [0], [1], [0, 0, 1, 1], [], []>} : vector<8x32xf32>, vector<32x96xf32>, vector<8x96xf32> -> vector<8x96xf32>
    %c6 = arith.constant 6 : index
    %c0_15 = arith.constant 0 : index
    %28 = vector.load %arg4[%c6, %c0_15] : memref<13x128xf32, #tpu.memory_space<vmem>>, vector<1x96xf32>
    %29 = vector.broadcast %28 : vector<1x96xf32> to vector<8x96xf32>
    %30 = arith.addf %27, %29 : vector<8x96xf32>
    %31 = tpu.iota {dimensions = array<i32: 0>} : vector<8x8xi32>
    %32 = tpu.iota {dimensions = array<i32: 1>} : vector<8x8xi32>
    %33 = arith.cmpi sge, %31, %32 : vector<8x8xi32>
    %cst_16 = arith.constant 0.000000e+00 : f32
    %cst_17 = arith.constant -1.000000e+30 : f32
    %34 = vector.broadcast %cst_16 : f32 to vector<8x8xf32>
    %35 = vector.broadcast %cst_17 : f32 to vector<8x8xf32>
    %36 = arith.select %33, %34, %35 : vector<8x8xi1>, vector<8x8xf32>
    %c0_18 = arith.constant 0 : index
    %c128 = arith.constant 128 : index
    %37 = vector.load %arg3[%c0_18, %c128] : memref<32x896xf32, #tpu.memory_space<vmem>>, vector<32x32xf32>
    %38 = vector.extract_strided_slice %30 {offsets = [0, 0], sizes = [8, 8], strides = [1, 1]} : vector<8x96xf32> to vector<8x8xf32>
    %39 = vector.extract_strided_slice %30 {offsets = [0, 32], sizes = [8, 8], strides = [1, 1]} : vector<8x96xf32> to vector<8x8xf32>
    %40 = vector.extract_strided_slice %30 {offsets = [0, 64], sizes = [8, 8], strides = [1, 1]} : vector<8x96xf32> to vector<8x8xf32>
    %cst_19 = arith.constant dense<0.000000e+00> : vector<8x8xf32>
    %41 = tpu.matmul %38, %39, %cst_19 {dimension_numbers = #tpu.dot_dimension_numbers<[1], [1], [0], [0], [0, 0, 1, 0], [], []>} : vector<8x8xf32>, vector<8x8xf32>, vector<8x8xf32> -> vector<8x8xf32>
    %42 = arith.addf %41, %36 : vector<8x8xf32>
    %cst_20 = arith.constant dense<0xFF800000> : vector<8xf32>
    %43 = vector.multi_reduction <maximumf>, %42, %cst_20 [1] : vector<8x8xf32> to vector<8xf32>
    %44 = vector.shape_cast %43 : vector<8xf32> to vector<8x1xf32>
    %45 = vector.broadcast %44 : vector<8x1xf32> to vector<8x8xf32>
    %46 = arith.subf %42, %45 : vector<8x8xf32>
    %47 = math.exp %46 : vector<8x8xf32>
    %cst_21 = arith.constant dense<0.000000e+00> : vector<8xf32>
    %48 = vector.multi_reduction <add>, %47, %cst_21 [1] : vector<8x8xf32> to vector<8xf32>
    %49 = vector.shape_cast %48 : vector<8xf32> to vector<8x1xf32>
    %cst_22 = arith.constant dense<0.000000e+00> : vector<8x8xf32>
    %50 = tpu.matmul %47, %40, %cst_22 {dimension_numbers = #tpu.dot_dimension_numbers<[1], [0], [0], [1], [0, 0, 1, 1], [], []>} : vector<8x8xf32>, vector<8x8xf32>, vector<8x8xf32> -> vector<8x8xf32>
    %51 = tpu.reciprocal %49 : vector<8x1xf32> -> vector<8x1xf32>
    %52 = vector.broadcast %51 : vector<8x1xf32> to vector<8x8xf32>
    %53 = arith.mulf %50, %52 : vector<8x8xf32>
    %54 = vector.extract_strided_slice %30 {offsets = [0, 8], sizes = [8, 8], strides = [1, 1]} : vector<8x96xf32> to vector<8x8xf32>
    %55 = vector.extract_strided_slice %30 {offsets = [0, 40], sizes = [8, 8], strides = [1, 1]} : vector<8x96xf32> to vector<8x8xf32>
    %56 = vector.extract_strided_slice %30 {offsets = [0, 72], sizes = [8, 8], strides = [1, 1]} : vector<8x96xf32> to vector<8x8xf32>
    %cst_23 = arith.constant dense<0.000000e+00> : vector<8x8xf32>
    %57 = tpu.matmul %54, %55, %cst_23 {dimension_numbers = #tpu.dot_dimension_numbers<[1], [1], [0], [0], [0, 0, 1, 0], [], []>} : vector<8x8xf32>, vector<8x8xf32>, vector<8x8xf32> -> vector<8x8xf32>
    %58 = arith.addf %57, %36 : vector<8x8xf32>
    %cst_24 = arith.constant dense<0xFF800000> : vector<8xf32>
    %59 = vector.multi_reduction <maximumf>, %58, %cst_24 [1] : vector<8x8xf32> to vector<8xf32>
    %60 = vector.shape_cast %59 : vector<8xf32> to vector<8x1xf32>
    %61 = vector.broadcast %60 : vector<8x1xf32> to vector<8x8xf32>
    %62 = arith.subf %58, %61 : vector<8x8xf32>
    %63 = math.exp %62 : vector<8x8xf32>
    %cst_25 = arith.constant dense<0.000000e+00> : vector<8xf32>
    %64 = vector.multi_reduction <add>, %63, %cst_25 [1] : vector<8x8xf32> to vector<8xf32>
    %65 = vector.shape_cast %64 : vector<8xf32> to vector<8x1xf32>
    %cst_26 = arith.constant dense<0.000000e+00> : vector<8x8xf32>
    %66 = tpu.matmul %63, %56, %cst_26 {dimension_numbers = #tpu.dot_dimension_numbers<[1], [0], [0], [1], [0, 0, 1, 1], [], []>} : vector<8x8xf32>, vector<8x8xf32>, vector<8x8xf32> -> vector<8x8xf32>
    %67 = tpu.reciprocal %65 : vector<8x1xf32> -> vector<8x1xf32>
    %68 = vector.broadcast %67 : vector<8x1xf32> to vector<8x8xf32>
    %69 = arith.mulf %66, %68 : vector<8x8xf32>
    %70 = vector.extract_strided_slice %30 {offsets = [0, 16], sizes = [8, 8], strides = [1, 1]} : vector<8x96xf32> to vector<8x8xf32>
    %71 = vector.extract_strided_slice %30 {offsets = [0, 48], sizes = [8, 8], strides = [1, 1]} : vector<8x96xf32> to vector<8x8xf32>
    %72 = vector.extract_strided_slice %30 {offsets = [0, 80], sizes = [8, 8], strides = [1, 1]} : vector<8x96xf32> to vector<8x8xf32>
    %cst_27 = arith.constant dense<0.000000e+00> : vector<8x8xf32>
    %73 = tpu.matmul %70, %71, %cst_27 {dimension_numbers = #tpu.dot_dimension_numbers<[1], [1], [0], [0], [0, 0, 1, 0], [], []>} : vector<8x8xf32>, vector<8x8xf32>, vector<8x8xf32> -> vector<8x8xf32>
    %74 = arith.addf %73, %36 : vector<8x8xf32>
    %cst_28 = arith.constant dense<0xFF800000> : vector<8xf32>
    %75 = vector.multi_reduction <maximumf>, %74, %cst_28 [1] : vector<8x8xf32> to vector<8xf32>
    %76 = vector.shape_cast %75 : vector<8xf32> to vector<8x1xf32>
    %77 = vector.broadcast %76 : vector<8x1xf32> to vector<8x8xf32>
    %78 = arith.subf %74, %77 : vector<8x8xf32>
    %79 = math.exp %78 : vector<8x8xf32>
    %cst_29 = arith.constant dense<0.000000e+00> : vector<8xf32>
    %80 = vector.multi_reduction <add>, %79, %cst_29 [1] : vector<8x8xf32> to vector<8xf32>
    %81 = vector.shape_cast %80 : vector<8xf32> to vector<8x1xf32>
    %cst_30 = arith.constant dense<0.000000e+00> : vector<8x8xf32>
    %82 = tpu.matmul %79, %72, %cst_30 {dimension_numbers = #tpu.dot_dimension_numbers<[1], [0], [0], [1], [0, 0, 1, 1], [], []>} : vector<8x8xf32>, vector<8x8xf32>, vector<8x8xf32> -> vector<8x8xf32>
    %83 = tpu.reciprocal %81 : vector<8x1xf32> -> vector<8x1xf32>
    %84 = vector.broadcast %83 : vector<8x1xf32> to vector<8x8xf32>
    %85 = arith.mulf %82, %84 : vector<8x8xf32>
    %86 = vector.extract_strided_slice %30 {offsets = [0, 24], sizes = [8, 8], strides = [1, 1]} : vector<8x96xf32> to vector<8x8xf32>
    %87 = vector.extract_strided_slice %30 {offsets = [0, 56], sizes = [8, 8], strides = [1, 1]} : vector<8x96xf32> to vector<8x8xf32>
    %88 = vector.extract_strided_slice %30 {offsets = [0, 88], sizes = [8, 8], strides = [1, 1]} : vector<8x96xf32> to vector<8x8xf32>
    %cst_31 = arith.constant dense<0.000000e+00> : vector<8x8xf32>
    %89 = tpu.matmul %86, %87, %cst_31 {dimension_numbers = #tpu.dot_dimension_numbers<[1], [1], [0], [0], [0, 0, 1, 0], [], []>} : vector<8x8xf32>, vector<8x8xf32>, vector<8x8xf32> -> vector<8x8xf32>
    %90 = arith.addf %89, %36 : vector<8x8xf32>
    %cst_32 = arith.constant dense<0xFF800000> : vector<8xf32>
    %91 = vector.multi_reduction <maximumf>, %90, %cst_32 [1] : vector<8x8xf32> to vector<8xf32>
    %92 = vector.shape_cast %91 : vector<8xf32> to vector<8x1xf32>
    %93 = vector.broadcast %92 : vector<8x1xf32> to vector<8x8xf32>
    %94 = arith.subf %90, %93 : vector<8x8xf32>
    %95 = math.exp %94 : vector<8x8xf32>
    %cst_33 = arith.constant dense<0.000000e+00> : vector<8xf32>
    %96 = vector.multi_reduction <add>, %95, %cst_33 [1] : vector<8x8xf32> to vector<8xf32>
    %97 = vector.shape_cast %96 : vector<8xf32> to vector<8x1xf32>
    %cst_34 = arith.constant dense<0.000000e+00> : vector<8x8xf32>
    %98 = tpu.matmul %95, %88, %cst_34 {dimension_numbers = #tpu.dot_dimension_numbers<[1], [0], [0], [1], [0, 0, 1, 1], [], []>} : vector<8x8xf32>, vector<8x8xf32>, vector<8x8xf32> -> vector<8x8xf32>
    %99 = tpu.reciprocal %97 : vector<8x1xf32> -> vector<8x1xf32>
    %100 = vector.broadcast %99 : vector<8x1xf32> to vector<8x8xf32>
    %101 = arith.mulf %98, %100 : vector<8x8xf32>
    %102 = tpu.concatenate %53, %69, %85, %101 in 1 : vector<8x8xf32>, vector<8x8xf32>, vector<8x8xf32>, vector<8x8xf32> -> vector<8x32xf32>
    %cst_35 = arith.constant dense<0.000000e+00> : vector<8x32xf32>
    %103 = tpu.matmul %102, %37, %cst_35 {dimension_numbers = #tpu.dot_dimension_numbers<[1], [0], [0], [1], [0, 0, 1, 1], [], []>} : vector<8x32xf32>, vector<32x32xf32>, vector<8x32xf32> -> vector<8x32xf32>
    %104 = arith.addf %1, %103 : vector<8x32xf32>
    %c7 = arith.constant 7 : index
    %c0_36 = arith.constant 0 : index
    %105 = vector.load %arg4[%c7, %c0_36] : memref<13x128xf32, #tpu.memory_space<vmem>>, vector<1x32xf32>
    %106 = vector.broadcast %105 : vector<1x32xf32> to vector<8x32xf32>
    %107 = arith.addf %104, %106 : vector<8x32xf32>
    %c2 = arith.constant 2 : index
    %c0_37 = arith.constant 0 : index
    %108 = vector.load %arg4[%c2, %c0_37] : memref<13x128xf32, #tpu.memory_space<vmem>>, vector<1x32xf32>
    %c3 = arith.constant 3 : index
    %c0_38 = arith.constant 0 : index
    %109 = vector.load %arg4[%c3, %c0_38] : memref<13x128xf32, #tpu.memory_space<vmem>>, vector<1x32xf32>
    %cst_39 = arith.constant dense<0.000000e+00> : vector<8xf32>
    %110 = vector.multi_reduction <add>, %107, %cst_39 [1] : vector<8x32xf32> to vector<8xf32>
    %111 = vector.shape_cast %110 : vector<8xf32> to vector<8x1xf32>
    %cst_40 = arith.constant 3.200000e+01 : f32
    %112 = vector.broadcast %cst_40 : f32 to vector<8x1xf32>
    %113 = arith.divf %111, %112 : vector<8x1xf32>
    %114 = vector.broadcast %113 : vector<8x1xf32> to vector<8x32xf32>
    %115 = arith.subf %107, %114 : vector<8x32xf32>
    %116 = arith.mulf %115, %115 : vector<8x32xf32>
    %cst_41 = arith.constant dense<0.000000e+00> : vector<8xf32>
    %117 = vector.multi_reduction <add>, %116, %cst_41 [1] : vector<8x32xf32> to vector<8xf32>
    %118 = vector.shape_cast %117 : vector<8xf32> to vector<8x1xf32>
    %cst_42 = arith.constant 3.200000e+01 : f32
    %119 = vector.broadcast %cst_42 : f32 to vector<8x1xf32>
    %120 = arith.divf %118, %119 : vector<8x1xf32>
    %cst_43 = arith.constant 9.99999974E-6 : f32
    %121 = vector.broadcast %cst_43 : f32 to vector<8x1xf32>
    %122 = arith.addf %120, %121 : vector<8x1xf32>
    %123 = math.rsqrt %122 : vector<8x1xf32>
    %124 = vector.broadcast %123 : vector<8x1xf32> to vector<8x32xf32>
    %125 = arith.mulf %115, %124 : vector<8x32xf32>
    %126 = vector.broadcast %108 : vector<1x32xf32> to vector<8x32xf32>
    %127 = arith.mulf %125, %126 : vector<8x32xf32>
    %128 = vector.broadcast %109 : vector<1x32xf32> to vector<8x32xf32>
    %129 = arith.addf %127, %128 : vector<8x32xf32>
    %c0_44 = arith.constant 0 : index
    %c256 = arith.constant 256 : index
    %130 = vector.load %arg3[%c0_44, %c256] : memref<32x896xf32, #tpu.memory_space<vmem>>, vector<32x32xf32>
    %cst_45 = arith.constant dense<0.000000e+00> : vector<8x32xf32>
    %131 = tpu.matmul %129, %130, %cst_45 {dimension_numbers = #tpu.dot_dimension_numbers<[1], [0], [0], [1], [0, 0, 1, 1], [], []>} : vector<8x32xf32>, vector<32x32xf32>, vector<8x32xf32> -> vector<8x32xf32>
    %c8 = arith.constant 8 : index
    %c0_46 = arith.constant 0 : index
    %132 = vector.load %arg4[%c8, %c0_46] : memref<13x128xf32, #tpu.memory_space<vmem>>, vector<1x32xf32>
    %133 = vector.broadcast %132 : vector<1x32xf32> to vector<8x32xf32>
    %134 = arith.addf %131, %133 : vector<8x32xf32>
    %c0_47 = arith.constant 0 : index
    %c384 = arith.constant 384 : index
    %135 = vector.load %arg3[%c0_47, %c384] : memref<32x896xf32, #tpu.memory_space<vmem>>, vector<32x64xf32>
    %cst_48 = arith.constant dense<0.000000e+00> : vector<16x64xf32>
    %136 = tpu.matmul %3, %135, %cst_48 {dimension_numbers = #tpu.dot_dimension_numbers<[1], [0], [0], [1], [0, 0, 1, 1], [], []>} : vector<16x32xf32>, vector<32x64xf32>, vector<16x64xf32> -> vector<16x64xf32>
    %c9 = arith.constant 9 : index
    %c0_49 = arith.constant 0 : index
    %137 = vector.load %arg4[%c9, %c0_49] : memref<13x128xf32, #tpu.memory_space<vmem>>, vector<1x64xf32>
    %138 = vector.broadcast %137 : vector<1x64xf32> to vector<16x64xf32>
    %139 = arith.addf %136, %138 : vector<16x64xf32>
    %c0_50 = arith.constant 0 : index
    %c512 = arith.constant 512 : index
    %140 = vector.load %arg3[%c0_50, %c512] : memref<32x896xf32, #tpu.memory_space<vmem>>, vector<32x32xf32>
    %141 = vector.extract_strided_slice %134 {offsets = [0, 0], sizes = [8, 8], strides = [1, 1]} : vector<8x32xf32> to vector<8x8xf32>
    %142 = vector.extract_strided_slice %139 {offsets = [0, 0], sizes = [16, 8], strides = [1, 1]} : vector<16x64xf32> to vector<16x8xf32>
    %143 = vector.extract_strided_slice %139 {offsets = [0, 32], sizes = [16, 8], strides = [1, 1]} : vector<16x64xf32> to vector<16x8xf32>
    %cst_51 = arith.constant dense<0.000000e+00> : vector<8x16xf32>
    %144 = tpu.matmul %141, %142, %cst_51 {dimension_numbers = #tpu.dot_dimension_numbers<[1], [1], [0], [0], [0, 0, 1, 0], [], []>} : vector<8x8xf32>, vector<16x8xf32>, vector<8x16xf32> -> vector<8x16xf32>
    %cst_52 = arith.constant dense<0xFF800000> : vector<8xf32>
    %145 = vector.multi_reduction <maximumf>, %144, %cst_52 [1] : vector<8x16xf32> to vector<8xf32>
    %146 = vector.shape_cast %145 : vector<8xf32> to vector<8x1xf32>
    %147 = vector.broadcast %146 : vector<8x1xf32> to vector<8x16xf32>
    %148 = arith.subf %144, %147 : vector<8x16xf32>
    %149 = math.exp %148 : vector<8x16xf32>
    %cst_53 = arith.constant dense<0.000000e+00> : vector<8xf32>
    %150 = vector.multi_reduction <add>, %149, %cst_53 [1] : vector<8x16xf32> to vector<8xf32>
    %151 = vector.shape_cast %150 : vector<8xf32> to vector<8x1xf32>
    %cst_54 = arith.constant dense<0.000000e+00> : vector<8x8xf32>
    %152 = tpu.matmul %149, %143, %cst_54 {dimension_numbers = #tpu.dot_dimension_numbers<[1], [0], [0], [1], [0, 0, 1, 1], [], []>} : vector<8x16xf32>, vector<16x8xf32>, vector<8x8xf32> -> vector<8x8xf32>
    %153 = tpu.reciprocal %151 : vector<8x1xf32> -> vector<8x1xf32>
    %154 = vector.broadcast %153 : vector<8x1xf32> to vector<8x8xf32>
    %155 = arith.mulf %152, %154 : vector<8x8xf32>
    %156 = vector.extract_strided_slice %134 {offsets = [0, 8], sizes = [8, 8], strides = [1, 1]} : vector<8x32xf32> to vector<8x8xf32>
    %157 = vector.extract_strided_slice %139 {offsets = [0, 8], sizes = [16, 8], strides = [1, 1]} : vector<16x64xf32> to vector<16x8xf32>
    %158 = vector.extract_strided_slice %139 {offsets = [0, 40], sizes = [16, 8], strides = [1, 1]} : vector<16x64xf32> to vector<16x8xf32>
    %cst_55 = arith.constant dense<0.000000e+00> : vector<8x16xf32>
    %159 = tpu.matmul %156, %157, %cst_55 {dimension_numbers = #tpu.dot_dimension_numbers<[1], [1], [0], [0], [0, 0, 1, 0], [], []>} : vector<8x8xf32>, vector<16x8xf32>, vector<8x16xf32> -> vector<8x16xf32>
    %cst_56 = arith.constant dense<0xFF800000> : vector<8xf32>
    %160 = vector.multi_reduction <maximumf>, %159, %cst_56 [1] : vector<8x16xf32> to vector<8xf32>
    %161 = vector.shape_cast %160 : vector<8xf32> to vector<8x1xf32>
    %162 = vector.broadcast %161 : vector<8x1xf32> to vector<8x16xf32>
    %163 = arith.subf %159, %162 : vector<8x16xf32>
    %164 = math.exp %163 : vector<8x16xf32>
    %cst_57 = arith.constant dense<0.000000e+00> : vector<8xf32>
    %165 = vector.multi_reduction <add>, %164, %cst_57 [1] : vector<8x16xf32> to vector<8xf32>
    %166 = vector.shape_cast %165 : vector<8xf32> to vector<8x1xf32>
    %cst_58 = arith.constant dense<0.000000e+00> : vector<8x8xf32>
    %167 = tpu.matmul %164, %158, %cst_58 {dimension_numbers = #tpu.dot_dimension_numbers<[1], [0], [0], [1], [0, 0, 1, 1], [], []>} : vector<8x16xf32>, vector<16x8xf32>, vector<8x8xf32> -> vector<8x8xf32>
    %168 = tpu.reciprocal %166 : vector<8x1xf32> -> vector<8x1xf32>
    %169 = vector.broadcast %168 : vector<8x1xf32> to vector<8x8xf32>
    %170 = arith.mulf %167, %169 : vector<8x8xf32>
    %171 = vector.extract_strided_slice %134 {offsets = [0, 16], sizes = [8, 8], strides = [1, 1]} : vector<8x32xf32> to vector<8x8xf32>
    %172 = vector.extract_strided_slice %139 {offsets = [0, 16], sizes = [16, 8], strides = [1, 1]} : vector<16x64xf32> to vector<16x8xf32>
    %173 = vector.extract_strided_slice %139 {offsets = [0, 48], sizes = [16, 8], strides = [1, 1]} : vector<16x64xf32> to vector<16x8xf32>
    %cst_59 = arith.constant dense<0.000000e+00> : vector<8x16xf32>
    %174 = tpu.matmul %171, %172, %cst_59 {dimension_numbers = #tpu.dot_dimension_numbers<[1], [1], [0], [0], [0, 0, 1, 0], [], []>} : vector<8x8xf32>, vector<16x8xf32>, vector<8x16xf32> -> vector<8x16xf32>
    %cst_60 = arith.constant dense<0xFF800000> : vector<8xf32>
    %175 = vector.multi_reduction <maximumf>, %174, %cst_60 [1] : vector<8x16xf32> to vector<8xf32>
    %176 = vector.shape_cast %175 : vector<8xf32> to vector<8x1xf32>
    %177 = vector.broadcast %176 : vector<8x1xf32> to vector<8x16xf32>
    %178 = arith.subf %174, %177 : vector<8x16xf32>
    %179 = math.exp %178 : vector<8x16xf32>
    %cst_61 = arith.constant dense<0.000000e+00> : vector<8xf32>
    %180 = vector.multi_reduction <add>, %179, %cst_61 [1] : vector<8x16xf32> to vector<8xf32>
    %181 = vector.shape_cast %180 : vector<8xf32> to vector<8x1xf32>
    %cst_62 = arith.constant dense<0.000000e+00> : vector<8x8xf32>
    %182 = tpu.matmul %179, %173, %cst_62 {dimension_numbers = #tpu.dot_dimension_numbers<[1], [0], [0], [1], [0, 0, 1, 1], [], []>} : vector<8x16xf32>, vector<16x8xf32>, vector<8x8xf32> -> vector<8x8xf32>
    %183 = tpu.reciprocal %181 : vector<8x1xf32> -> vector<8x1xf32>
    %184 = vector.broadcast %183 : vector<8x1xf32> to vector<8x8xf32>
    %185 = arith.mulf %182, %184 : vector<8x8xf32>
    %186 = vector.extract_strided_slice %134 {offsets = [0, 24], sizes = [8, 8], strides = [1, 1]} : vector<8x32xf32> to vector<8x8xf32>
    %187 = vector.extract_strided_slice %139 {offsets = [0, 24], sizes = [16, 8], strides = [1, 1]} : vector<16x64xf32> to vector<16x8xf32>
    %188 = vector.extract_strided_slice %139 {offsets = [0, 56], sizes = [16, 8], strides = [1, 1]} : vector<16x64xf32> to vector<16x8xf32>
    %cst_63 = arith.constant dense<0.000000e+00> : vector<8x16xf32>
    %189 = tpu.matmul %186, %187, %cst_63 {dimension_numbers = #tpu.dot_dimension_numbers<[1], [1], [0], [0], [0, 0, 1, 0], [], []>} : vector<8x8xf32>, vector<16x8xf32>, vector<8x16xf32> -> vector<8x16xf32>
    %cst_64 = arith.constant dense<0xFF800000> : vector<8xf32>
    %190 = vector.multi_reduction <maximumf>, %189, %cst_64 [1] : vector<8x16xf32> to vector<8xf32>
    %191 = vector.shape_cast %190 : vector<8xf32> to vector<8x1xf32>
    %192 = vector.broadcast %191 : vector<8x1xf32> to vector<8x16xf32>
    %193 = arith.subf %189, %192 : vector<8x16xf32>
    %194 = math.exp %193 : vector<8x16xf32>
    %cst_65 = arith.constant dense<0.000000e+00> : vector<8xf32>
    %195 = vector.multi_reduction <add>, %194, %cst_65 [1] : vector<8x16xf32> to vector<8xf32>
    %196 = vector.shape_cast %195 : vector<8xf32> to vector<8x1xf32>
    %cst_66 = arith.constant dense<0.000000e+00> : vector<8x8xf32>
    %197 = tpu.matmul %194, %188, %cst_66 {dimension_numbers = #tpu.dot_dimension_numbers<[1], [0], [0], [1], [0, 0, 1, 1], [], []>} : vector<8x16xf32>, vector<16x8xf32>, vector<8x8xf32> -> vector<8x8xf32>
    %198 = tpu.reciprocal %196 : vector<8x1xf32> -> vector<8x1xf32>
    %199 = vector.broadcast %198 : vector<8x1xf32> to vector<8x8xf32>
    %200 = arith.mulf %197, %199 : vector<8x8xf32>
    %201 = tpu.concatenate %155, %170, %185, %200 in 1 : vector<8x8xf32>, vector<8x8xf32>, vector<8x8xf32>, vector<8x8xf32> -> vector<8x32xf32>
    %cst_67 = arith.constant dense<0.000000e+00> : vector<8x32xf32>
    %202 = tpu.matmul %201, %140, %cst_67 {dimension_numbers = #tpu.dot_dimension_numbers<[1], [0], [0], [1], [0, 0, 1, 1], [], []>} : vector<8x32xf32>, vector<32x32xf32>, vector<8x32xf32> -> vector<8x32xf32>
    %203 = arith.addf %107, %202 : vector<8x32xf32>
    %c10 = arith.constant 10 : index
    %c0_68 = arith.constant 0 : index
    %204 = vector.load %arg4[%c10, %c0_68] : memref<13x128xf32, #tpu.memory_space<vmem>>, vector<1x32xf32>
    %205 = vector.broadcast %204 : vector<1x32xf32> to vector<8x32xf32>
    %206 = arith.addf %203, %205 : vector<8x32xf32>
    %c4 = arith.constant 4 : index
    %c0_69 = arith.constant 0 : index
    %207 = vector.load %arg4[%c4, %c0_69] : memref<13x128xf32, #tpu.memory_space<vmem>>, vector<1x32xf32>
    %c5 = arith.constant 5 : index
    %c0_70 = arith.constant 0 : index
    %208 = vector.load %arg4[%c5, %c0_70] : memref<13x128xf32, #tpu.memory_space<vmem>>, vector<1x32xf32>
    %cst_71 = arith.constant dense<0.000000e+00> : vector<8xf32>
    %209 = vector.multi_reduction <add>, %206, %cst_71 [1] : vector<8x32xf32> to vector<8xf32>
    %210 = vector.shape_cast %209 : vector<8xf32> to vector<8x1xf32>
    %cst_72 = arith.constant 3.200000e+01 : f32
    %211 = vector.broadcast %cst_72 : f32 to vector<8x1xf32>
    %212 = arith.divf %210, %211 : vector<8x1xf32>
    %213 = vector.broadcast %212 : vector<8x1xf32> to vector<8x32xf32>
    %214 = arith.subf %206, %213 : vector<8x32xf32>
    %215 = arith.mulf %214, %214 : vector<8x32xf32>
    %cst_73 = arith.constant dense<0.000000e+00> : vector<8xf32>
    %216 = vector.multi_reduction <add>, %215, %cst_73 [1] : vector<8x32xf32> to vector<8xf32>
    %217 = vector.shape_cast %216 : vector<8xf32> to vector<8x1xf32>
    %cst_74 = arith.constant 3.200000e+01 : f32
    %218 = vector.broadcast %cst_74 : f32 to vector<8x1xf32>
    %219 = arith.divf %217, %218 : vector<8x1xf32>
    %cst_75 = arith.constant 9.99999974E-6 : f32
    %220 = vector.broadcast %cst_75 : f32 to vector<8x1xf32>
    %221 = arith.addf %219, %220 : vector<8x1xf32>
    %222 = math.rsqrt %221 : vector<8x1xf32>
    %223 = vector.broadcast %222 : vector<8x1xf32> to vector<8x32xf32>
    %224 = arith.mulf %214, %223 : vector<8x32xf32>
    %225 = vector.broadcast %207 : vector<1x32xf32> to vector<8x32xf32>
    %226 = arith.mulf %224, %225 : vector<8x32xf32>
    %227 = vector.broadcast %208 : vector<1x32xf32> to vector<8x32xf32>
    %228 = arith.addf %226, %227 : vector<8x32xf32>
    %c0_76 = arith.constant 0 : index
    %c640 = arith.constant 640 : index
    %229 = vector.load %arg3[%c0_76, %c640] : memref<32x896xf32, #tpu.memory_space<vmem>>, vector<32x64xf32>
    %cst_77 = arith.constant dense<0.000000e+00> : vector<8x64xf32>
    %230 = tpu.matmul %228, %229, %cst_77 {dimension_numbers = #tpu.dot_dimension_numbers<[1], [0], [0], [1], [0, 0, 1, 1], [], []>} : vector<8x32xf32>, vector<32x64xf32>, vector<8x64xf32> -> vector<8x64xf32>
    %c11 = arith.constant 11 : index
    %c0_78 = arith.constant 0 : index
    %231 = vector.load %arg4[%c11, %c0_78] : memref<13x128xf32, #tpu.memory_space<vmem>>, vector<1x64xf32>
    %232 = vector.broadcast %231 : vector<1x64xf32> to vector<8x64xf32>
    %233 = arith.addf %230, %232 : vector<8x64xf32>
    %cst_79 = arith.constant 5.000000e-01 : f32
    %234 = vector.broadcast %cst_79 : f32 to vector<8x64xf32>
    %235 = arith.mulf %234, %233 : vector<8x64xf32>
    %cst_80 = arith.constant 0.707106769 : f32
    %236 = vector.broadcast %cst_80 : f32 to vector<8x64xf32>
    %237 = arith.mulf %233, %236 : vector<8x64xf32>
    %238 = math.erf %237 : vector<8x64xf32>
    %cst_81 = arith.constant 1.000000e+00 : f32
    %239 = vector.broadcast %cst_81 : f32 to vector<8x64xf32>
    %240 = arith.addf %239, %238 : vector<8x64xf32>
    %241 = arith.mulf %235, %240 : vector<8x64xf32>
    %c0_82 = arith.constant 0 : index
    %c768 = arith.constant 768 : index
    %242 = vector.load %arg3[%c0_82, %c768] : memref<32x896xf32, #tpu.memory_space<vmem>>, vector<32x64xf32>
    %cst_83 = arith.constant dense<0.000000e+00> : vector<8x32xf32>
    %243 = tpu.matmul %241, %242, %cst_83 {dimension_numbers = #tpu.dot_dimension_numbers<[1], [1], [0], [0], [0, 0, 1, 0], [], []>} : vector<8x64xf32>, vector<32x64xf32>, vector<8x32xf32> -> vector<8x32xf32>
    %c12 = arith.constant 12 : index
    %c0_84 = arith.constant 0 : index
    %244 = vector.load %arg4[%c12, %c0_84] : memref<13x128xf32, #tpu.memory_space<vmem>>, vector<1x32xf32>
    %245 = vector.broadcast %244 : vector<1x32xf32> to vector<8x32xf32>
    %246 = arith.addf %243, %245 : vector<8x32xf32>
    %247 = arith.addf %206, %246 : vector<8x32xf32>
    %cst_85 = arith.constant 0.000000e+00 : f32
    %248 = vector.broadcast %cst_85 : f32 to vector<8x96xf32>
    %249 = tpu.concatenate %247, %248 in 1 : vector<8x32xf32>, vector<8x96xf32> -> vector<8x128xf32>
    %c0_86 = arith.constant 0 : index
    %c0_87 = arith.constant 0 : index
    %c0_88 = arith.constant 0 : index
    %250 = vector.load %arg5[%c0_86, %c0_87, %c0_88] : memref<1x8x128xf32, #tpu.memory_space<vmem>>, vector<1x8x128xf32>
    %251 = vector.shape_cast %250 : vector<1x8x128xf32> to vector<8x128xf32>
    %252 = vector.shape_cast %249 : vector<8x128xf32> to vector<1x8x128xf32>
    tpu.vector_store %arg5[%c0_86, %c0_87, %c0_88], %252 {strides = array<i32>} : memref<1x8x128xf32, #tpu.memory_space<vmem>>, vector<1x8x128xf32>,
    return
  }
  func.func @transform_0(%arg0: i32) -> (i32, i32, i32) {
    %c0_i32 = arith.constant 0 : i32
    %c0_i32_0 = arith.constant 0 : i32
    %c0_i32_1 = arith.constant 0 : i32
    return %arg0, %c0_i32, %c0_i32_0 : i32, i32, i32
  }
  func.func @transform_1(%arg0: i32) -> (i32, i32, i32) {
    %c0_i32 = arith.constant 0 : i32
    %c0_i32_0 = arith.constant 0 : i32
    %c0_i32_1 = arith.constant 0 : i32
    return %arg0, %c0_i32, %c0_i32_0 : i32, i32, i32
  }
  func.func @transform_2(%arg0: i32) -> (i32, i32) {
    %c0_i32 = arith.constant 0 : i32
    %c0_i32_0 = arith.constant 0 : i32
    %c0_i32_1 = arith.constant 0 : i32
    return %c0_i32, %c0_i32_0 : i32, i32
  }
  func.func @transform_3(%arg0: i32) -> (i32, i32) {
    %c0_i32 = arith.constant 0 : i32
    %c0_i32_0 = arith.constant 0 : i32
    %c0_i32_1 = arith.constant 0 : i32
    return %c0_i32, %c0_i32_0 : i32, i32
  }
  func.func @transform_4(%arg0: i32) -> (i32, i32, i32) {
    %c0_i32 = arith.constant 0 : i32
    %c0_i32_0 = arith.constant 0 : i32
    %c0_i32_1 = arith.constant 0 : i32
    return %arg0, %c0_i32, %c0_i32_0 : i32, i32, i32
  }
}

</mosaic_0001>

<llo_original>
// kernel: whisper_decoder_layer.1
$region0: #{whisper_decoder_layer.1}
  #allocation0 [shape = 'u32[]', space=smem, size = 0x4, offset = 0x4, fixed_abs, tag = 'smem constant byte address 0x4 - core index']
  #allocation1 [shape = 'u32[144,128]{1,0:T(1,128)}', space=vmem, size = 0x12000, scoped, tag = 'internal scratch']
  %s0 = inlined_call_operand.hbm [shape: f32[2,8,32], index: 0, kind: input, shape index: {}]
  %s1 = inlined_call_operand.hbm [shape: f32[2,16,32], index: 1, kind: input, shape index: {}]
  %s2 = inlined_call_operand.hbm [shape: f32[32,896], index: 2, kind: input, shape index: {}]
  %s3 = inlined_call_operand.hbm [shape: f32[13,128], index: 3, kind: input, shape index: {}]
  %s4 = inlined_call_operand.hbm [shape: f32[2,8,128], index: 4, kind: output, shape index: {}]
  %s5 = sld [smem:[#allocation0]]
  $region65: #{whisper_decoder_layer.1} parent=0
    _
  %s7 = ssub.s32 1, %s5
  %s8 = scalar_select 0, %s7, %s5
  $region1: #{whisper_decoder_layer.1} parent=0
    #allocation2 [shape = 'u8[8192]{0}', space=vmem, size = 0x2000, scoped, tag = 'input window, operand 0']
    #allocation3 [shape = 's32[2]{0}', space=sflag, size = 0x8, scoped, tag = 'scoped memory for whisper_decoder_layer.1']
    #allocation4 [shape = 's32[2]{0}', space=sflag, size = 0x8, scoped, tag = 'scoped memory for whisper_decoder_layer.1']
    #allocation5 [shape = 'u8[16384]{0}', space=vmem, size = 0x4000, scoped, tag = 'input window, operand 1']
    #allocation6 [shape = 's32[2]{0}', space=sflag, size = 0x8, scoped, tag = 'scoped memory for whisper_decoder_layer.1']
    #allocation7 [shape = 'u8[114688]{0}', space=vmem, size = 0x1c000, scoped, tag = 'input window, operand 2, single buffered']
    #allocation8 [shape = 'u8[8192]{0}', space=vmem, size = 0x2000, scoped, tag = 'input window, operand 3, single buffered']
    #allocation9 [shape = 's32[1]{0}', space=sflag, size = 0x4, scoped, tag = 'scoped memory for whisper_decoder_layer.1']
    #allocation10 [shape = 'u8[8192]{0}', space=vmem, size = 0x2000, scoped, tag = 'output window, operand 0']
    %9 = vsyncpa [#allocation3], 0
    %s10 = scalar_lea.sflag [#allocation3], 1
    %11 = vsyncpa %s10, 0
    %12 = vsyncpa [#allocation6], 0
    %s13 = scalar_lea.sflag [#allocation6], 1
    %14 = vsyncpa %s13, 0
    %15 = vsyncpa [#allocation9], 0
    %16 = vsyncpa [#allocation4], 0
    %s17 = scalar_lea.sflag [#allocation4], 1
    %18 = vsyncpa %s17, 0
    loop: start=0, step=1, limit=4
    $region2: #{whisper_decoder_layer.1} parent=1 // loop_pre_header
      _
    $region3: #{whisper_decoder_layer.1} parent=1 // loop_header
      %s20 = sphi 0, %s24
      %p21 = scmp.ge.s32.totalorder %s20, 4
      %s30 = sphi 0, %s32
      %s33 = sphi 0, %s30
      %s34 = sphi 0, %s33
      %s50 = sphi 0, %s34
      %s56 = sphi 0, %s58
      %s59 = sphi 0, %s56
      %s60 = sphi 0, %s59
      %s76 = sphi 0, %s60
      %s80 = sphi 0, %s80
      %s82 = sphi 0, %s80
      %s83 = sphi 0, %s82
      %s97 = sphi 0, %s83
      %s101 = sphi 0, %s101
      %s103 = sphi 0, %s101
      %s104 = sphi 0, %s103
      %s118 = sphi 0, %s104
      %s124 = sphi 0, %s126
      %s127 = sphi 0, %s124
      %s128 = sphi 0, %s127
      %s144 = sphi 0, %s128
    $region4: #{whisper_decoder_layer.1} parent=1 // loop_header_branch
      %23 = sbr.rel (%p21) target = $region8
    $region5: #{whisper_decoder_layer.1} parent=1 // loop_body
      %s25 = ssub.s32 %s20, 1
      %s26 = ssub.s32 %s20, 2
      %s27 = sadd.s32 %s20, 1
      %s28 = ssub.s32 %s20, %s27
      %p29 = scmp.eq.s32.totalorder %s28, 0
      %s31 = sadd.s32 %s30, 1
      %s32 = scalar_select %p29, %s30, %s31
      %p35 = pneg %p29
      %p36 = scmp.eq.s32.totalorder %s20, 1
      %p37 = por %p35, %p36
      %p38 = scmp.ne.s32.totalorder %s30, %s33
      %p39 = scmp.eq.s32.totalorder %s20, 0
      %p40 = por %p38, %p39
      %p41 = scmp.ne.s32.totalorder %s30, %s33
      %p42 = scmp.eq.s32.totalorder %s25, 1
      %p43 = por %p41, %p42
      %p44 = scmp.ne.s32.totalorder %s33, %s34
      %p45 = scmp.eq.s32.totalorder %s25, 0
      %p46 = por %p44, %p45
      %p47 = scmp.ne.s32.totalorder %s33, %s34
      %p48 = scmp.eq.s32.totalorder %s26, 1
      %p49 = por %p47, %p48
      %p51 = scmp.ne.s32.totalorder %s34, %s50
      %p52 = scmp.eq.s32.totalorder %s26, 0
      %p53 = por %p51, %p52
      %s54 = ssub.s32 %s20, %s27
      %p55 = scmp.eq.s32.totalorder %s54, 0
      %s57 = sadd.s32 %s56, 1
      %s58 = scalar_select %p55, %s56, %s57
      %p61 = pneg %p55
      %p62 = scmp.eq.s32.totalorder %s20, 1
      %p63 = por %p61, %p62
      %p64 = scmp.ne.s32.totalorder %s56, %s59
      %p65 = scmp.eq.s32.totalorder %s20, 0
      %p66 = por %p64, %p65
      %p67 = scmp.ne.s32.totalorder %s56, %s59
      %p68 = scmp.eq.s32.totalorder %s25, 1
      %p69 = por %p67, %p68
      %p70 = scmp.ne.s32.totalorder %s59, %s60
      %p71 = scmp.eq.s32.totalorder %s25, 0
      %p72 = por %p70, %p71
      %p73 = scmp.ne.s32.totalorder %s59, %s60
      %p74 = scmp.eq.s32.totalorder %s26, 1
      %p75 = por %p73, %p74
      %p77 = scmp.ne.s32.totalorder %s60, %s76
      %p78 = scmp.eq.s32.totalorder %s26, 0
      %p79 = por %p77, %p78
      %s81 = sadd.s32 %s80, 1
      %p84 = scmp.eq.s32.totalorder %s20, 1
      %p85 = scmp.ne.s32.totalorder %s80, %s82
      %p86 = scmp.eq.s32.totalorder %s20, 0
      %p87 = por %p85, %p86
      %p88 = scmp.ne.s32.totalorder %s80, %s82
      %p89 = scmp.eq.s32.totalorder %s25, 1
      %p90 = por %p88, %p89
      %p91 = scmp.ne.s32.totalorder %s82, %s83
      %p92 = scmp.eq.s32.totalorder %s25, 0
      %p93 = por %p91, %p92
      %p94 = scmp.ne.s32.totalorder %s82, %s83
      %p95 = scmp.eq.s32.totalorder %s26, 1
      %p96 = por %p94, %p95
      %p98 = scmp.ne.s32.totalorder %s83, %s97
      %p99 = scmp.eq.s32.totalorder %s26, 0
      %p100 = por %p98, %p99
      %s102 = sadd.s32 %s101, 1
      %p105 = scmp.eq.s32.totalorder %s20, 1
      %p106 = scmp.ne.s32.totalorder %s101, %s103
      %p107 = scmp.eq.s32.totalorder %s20, 0
      %p108 = por %p106, %p107
      %p109 = scmp.ne.s32.totalorder %s101, %s103
      %p110 = scmp.eq.s32.totalorder %s25, 1
      %p111 = por %p109, %p110
      %p112 = scmp.ne.s32.totalorder %s103, %s104
      %p113 = scmp.eq.s32.totalorder %s25, 0
      %p114 = por %p112, %p113
      %p115 = scmp.ne.s32.totalorder %s103, %s104
      %p116 = scmp.eq.s32.totalorder %s26, 1
      %p117 = por %p115, %p116
      %p119 = scmp.ne.s32.totalorder %s104, %s118
      %p120 = scmp.eq.s32.totalorder %s26, 0
      %p121 = por %p119, %p120
      %s122 = ssub.s32 %s20, %s27
      %p123 = scmp.eq.s32.totalorder %s122, 0
      %s125 = sadd.s32 %s124, 1
      %s126 = scalar_select %p123, %s124, %s125
      %p129 = pneg %p123
      %p130 = scmp.eq.s32.totalorder %s20, 1
      %p131 = por %p129, %p130
      %p132 = scmp.ne.s32.totalorder %s124, %s127
      %p133 = scmp.eq.s32.totalorder %s20, 0
      %p134 = por %p132, %p133
      %p135 = scmp.ne.s32.totalorder %s124, %s127
      %p136 = scmp.eq.s32.totalorder %s25, 1
      %p137 = por %p135, %p136
      %p138 = scmp.ne.s32.totalorder %s127, %s128
      %p139 = scmp.eq.s32.totalorder %s25, 0
      %p140 = por %p138, %p139
      %p141 = scmp.ne.s32.totalorder %s127, %s128
      %p142 = scmp.eq.s32.totalorder %s26, 1
      %p143 = por %p141, %p142
      %p145 = scmp.ne.s32.totalorder %s128, %s144
      %p146 = scmp.eq.s32.totalorder %s26, 0
      %p147 = por %p145, %p146
      %p148 = scmp.le.s32.totalorder 1, %s20
      %p149 = scmp.lt.s32.totalorder %s20, 3
      %p150 = pnand %p148, %p149
      %p151 = pneg %p150
      // Predicated region
      $region9: #{whisper_decoder_layer.1} parent=5 // pred_check
        _
      $region10: #{whisper_decoder_layer.1} parent=5 // pred_check_branch
        %153 = sbr.rel (%p150) target = $region12
      $region11: #{whisper_decoder_layer.1} parent=5 // pred_region
        %s154 = ssub.s32 %s20, 1
        // Predicated region
        $region13: #{whisper_decoder_layer.1} parent=11 // pred_check
          %p155 = pneg %p93
        $region14: #{whisper_decoder_layer.1} parent=11 // pred_check_branch
          %157 = sbr.rel (%p155) target = $region16
        $region15: #{whisper_decoder_layer.1} parent=11 // pred_region
          %s159 = ssub.s32 3584, 3584
          %160 = vsyncadd [#allocation6], %s159
          %s161 = sshll.u32 [#allocation7], 4
          %s162 = int_to_ptr.vmem [resolvable:$true] %s161
          %167 = dma.hbm_to_vmem [thread:$0]  %s2, 3584, %s162, [#allocation6], 896, 896, 56
        $region16: #{whisper_decoder_layer.1} parent=11 // pred_fallthru
          _
        // Predicated region
        $region17: #{whisper_decoder_layer.1} parent=11 // pred_check
          %p168 = pneg %p114
        $region18: #{whisper_decoder_layer.1} parent=11 // pred_check_branch
          %170 = sbr.rel (%p168) target = $region20
        $region19: #{whisper_decoder_layer.1} parent=11 // pred_region
          %s172 = ssub.s32 256, 256
          %173 = vsyncadd [#allocation9], %s172
          %s174 = sshll.u32 [#allocation8], 4
          %s175 = int_to_ptr.vmem [resolvable:$true] %s174
          %180 = dma.hbm_to_vmem [thread:$0]  %s3, 256, %s175, [#allocation9], 128, 128, 8
        $region20: #{whisper_decoder_layer.1} parent=11 // pred_fallthru
          _
      $region12: #{whisper_decoder_layer.1} parent=5 // pred_fallthru
        _
      %p181 = scmp.lt.s32.totalorder %s20, 2
      // Predicated region
      $region21: #{whisper_decoder_layer.1} parent=5 // pred_check
        %p182 = pneg %p181
      $region22: #{whisper_decoder_layer.1} parent=5 // pred_check_branch
        %184 = sbr.rel (%p182) target = $region24
      $region23: #{whisper_decoder_layer.1} parent=5 // pred_region
        // Predicated region
        $region25: #{whisper_decoder_layer.1} parent=23 // pred_check
          %p185 = pneg %p40
        $region26: #{whisper_decoder_layer.1} parent=23 // pred_check_branch
          %187 = sbr.rel (%p185) target = $region28
        $region27: #{whisper_decoder_layer.1} parent=23 // pred_region
          %s188 = sand.u32 %s30, 1
          %s189 = scalar_lea.sflag [#allocation3], %s188
          %s190 = sand.u32 %s30, 1
          %s191 = smul.addr %s190, 8
          %s192 = scalar_lea.vmem [#allocation2], %s191
          %s194 = ssub.s32 128, 128
          %195 = vsyncadd %s189, %s194
          %s196 = smul.addr %s20, 128
          %s197 = scalar_lea.hbm %s0, %s196
          %s199 = sshll.u32 %s192, 4
          %s200 = int_to_ptr.vmem [resolvable:$true] %s199
          %202 = dma.hbm_to_vmem [thread:$0]  %s197, 128, %s200, %s189
        $region28: #{whisper_decoder_layer.1} parent=23 // pred_fallthru
          _
        // Predicated region
        $region29: #{whisper_decoder_layer.1} parent=23 // pred_check
          %p203 = pneg %p66
        $region30: #{whisper_decoder_layer.1} parent=23 // pred_check_branch
          %205 = sbr.rel (%p203) target = $region32
        $region31: #{whisper_decoder_layer.1} parent=23 // pred_region
          %s206 = sand.u32 %s20, 1
          %s207 = scalar_lea.sflag [#allocation6], %s206
          %s208 = sand.u32 %s56, 1
          %s209 = smul.addr %s208, 16
          %s210 = scalar_lea.vmem [#allocation5], %s209
          %s212 = ssub.s32 256, 256
          %213 = vsyncadd %s207, %s212
          %s214 = smul.addr %s20, 2
          %s215 = smul.addr %s214, 128
          %s216 = scalar_lea.hbm %s1, %s215
          %s217 = sshll.u32 %s210, 4
          %s218 = int_to_ptr.vmem [resolvable:$true] %s217
          %223 = dma.hbm_to_vmem [thread:$0]  %s216, 256, %s218, %s207, 128, 128, 8
        $region32: #{whisper_decoder_layer.1} parent=23 // pred_fallthru
          _
      $region24: #{whisper_decoder_layer.1} parent=5 // pred_fallthru
        _
      %p224 = scmp.le.s32.totalorder 1, %s20
      %p225 = scmp.lt.s32.totalorder %s20, 3
      %p226 = pnand %p224, %p225
      %p227 = pneg %p226
      // Predicated region
      $region33: #{whisper_decoder_layer.1} parent=5 // pred_check
        _
      $region34: #{whisper_decoder_layer.1} parent=5 // pred_check_branch
        %229 = sbr.rel (%p226) target = $region36
      $region35: #{whisper_decoder_layer.1} parent=5 // pred_region
        %s230 = ssub.s32 %s20, 1
        %s231 = sand.u32 %s33, 1
        %s232 = scalar_lea.sflag [#allocation3], %s231
        %s233 = sand.u32 %s33, 1
        %s234 = smul.addr %s233, 8
        %s235 = scalar_lea.vmem [#allocation2], %s234
        // Predicated region
        $region37: #{whisper_decoder_layer.1} parent=35 // pred_check
          %p236 = pneg %p46
        $region38: #{whisper_decoder_layer.1} parent=35 // pred_check_branch
          %238 = sbr.rel (%p236) target = $region40
        $region39: #{whisper_decoder_layer.1} parent=35 // pred_region
          %239 = dma.done %s232, 128
        $region40: #{whisper_decoder_layer.1} parent=35 // pred_fallthru
          _
        %s240 = sand.u32 %s25, 1
        %s241 = scalar_lea.sflag [#allocation6], %s240
        %s242 = sand.u32 %s59, 1
        %s243 = smul.addr %s242, 16
        %s244 = scalar_lea.vmem [#allocation5], %s243
        // Predicated region
        $region41: #{whisper_decoder_layer.1} parent=35 // pred_check
          %p245 = pneg %p72
        $region42: #{whisper_decoder_layer.1} parent=35 // pred_check_branch
          %247 = sbr.rel (%p245) target = $region44
        $region43: #{whisper_decoder_layer.1} parent=35 // pred_region
          %248 = dma.done %s241, 256
        $region44: #{whisper_decoder_layer.1} parent=35 // pred_fallthru
          _
        // Predicated region
        $region45: #{whisper_decoder_layer.1} parent=35 // pred_check
          %p249 = pneg %p93
        $region46: #{whisper_decoder_layer.1} parent=35 // pred_check_branch
          %251 = sbr.rel (%p249) target = $region48
        $region47: #{whisper_decoder_layer.1} parent=35 // pred_region
          %252 = dma.done [#allocation6], 3584
        $region48: #{whisper_decoder_layer.1} parent=35 // pred_fallthru
          _
        // Predicated region
        $region49: #{whisper_decoder_layer.1} parent=35 // pred_check
          %p253 = pneg %p114
        $region50: #{whisper_decoder_layer.1} parent=35 // pred_check_branch
          %255 = sbr.rel (%p253) target = $region52
        $region51: #{whisper_decoder_layer.1} parent=35 // pred_region
          %256 = dma.done [#allocation9], 256
        $region52: #{whisper_decoder_layer.1} parent=35 // pred_fallthru
          _
        %s257 = sand.u32 %s33, 1
        %s258 = scalar_lea.sflag [#allocation3], %s257
        %s259 = sand.u32 %s33, 1
        %s260 = smul.addr %s259, 8
        %s261 = scalar_lea.vmem [#allocation2], %s260
        %p262 = pneg %p46
        %p263 = pneg %p43
        %s264 = sand.u32 %s25, 1
        %s265 = scalar_lea.sflag [#allocation6], %s264
        %s266 = sand.u32 %s59, 1
        %s267 = smul.addr %s266, 16
        %s268 = scalar_lea.vmem [#allocation5], %s267
        %p269 = pneg %p72
        %p270 = pneg %p69
        %p271 = pneg %p93
        %p272 = pneg %p90
        %p273 = pneg %p114
        %p274 = pneg %p111
        %p275 = pneg %p140
        %p276 = pneg %p137
        %s277 = sand.u32 %s127, 1
        %s278 = scalar_lea.sflag [#allocation4], %s277
        %s279 = sand.u32 %s127, 1
        %s280 = smul.addr %s279, 8
        %s281 = scalar_lea.vmem [#allocation10], %s280
        %v282 = vld [vmem:[%s235] sm:$0xff]
        %v283 = vld [vmem:[%s244] sm:$0xff]
        %v284 = vld [vmem:[%s244 + $0x8] sm:$0xff]
        %v285 = vld [vmem:[#allocation8] sm:$0x1]
        %v286 = vld [vmem:[#allocation8 + $0x1] sm:$0x1]
        %vm287 = vcmask 261120
        %v288 = vsel %vm287, %v282, 0.0
        %289 = vadd.xlane.f32.xlu0 %v288
        %v290 = vpop.xlane.xlu0 %289
        %v291 = vrcp.pop 32.0
        %v292 = vmul.f32 %v290, %v291
        %v293 = vsub.f32 %v282, %v292
        %v294 = vmul.f32 %v293, %v293
        %v295 = vsel %vm287, %v294, 0.0
        %296 = vadd.xlane.f32.xlu0 %v295
        %v297 = vpop.xlane.xlu0 %296
        %v298 = vmul.f32 %v297, %v291
        %v299 = vadd.f32 %v298, 1e-05
        %v300 = vrsqrt.pop %v299
        %v301 = vmul.f32 %v293, %v300
        %v302 = vlaneseq
        %v303 = vshrl.u32 %v302, 7
        %v304 = vsub.s32 0, %v303
        %v305 = vrot.slane %v285, %v304
        %v306 = vmul.f32 %v301, %v305
        %v307 = vlaneseq
        %v308 = vshrl.u32 %v307, 7
        %v309 = vsub.s32 0, %v308
        %v310 = vrot.slane %v286, %v309
        %v311 = vadd.f32 %v306, %v310
        %v312 = vld [vmem:[#allocation7] sm:$0xff]
        %v313 = vld [vmem:[#allocation7 + $0x38] sm:$0xff]
        %v314 = vld [vmem:[#allocation7 + $0x70] sm:$0xff]
        %v315 = vld [vmem:[#allocation7 + $0xa8] sm:$0xff]
        %v316 = vld [vmem:[#allocation8 + $0x6] sm:$0x1]
        %v317 = vlaneseq
        %v318 = vshrl.u32 %v317, 7
        %v319 = vsub.s32 0, %v318
        %v320 = vrot.slane %v316, %v319
        %v322 = vsel %vm287, %v311, 0
        %324 = vmatprep.subr.mxu0 0.0
        %325 = vmatpush1.msra.mxu0 %v312
        %326 = vmatprep.subr.mxu0 0.0
        %327 = vmatpush1.msra.mxu0 %v313
        %328 = vmatprep.subr.mxu0 0.0
        %329 = vmatpush1.msra.mxu0 %v314
        %330 = vmatprep.subr.mxu0 0.0
        %331 = vmatpush1.msra.mxu0 %v315
        %332 = vmatprep.subr.mxu0 0.0
        %333 = vmatpush1.msra.mxu0 0.0
        %334 = vmatprep.subr.mxu0 0.0
        %335 = vmatpush1.msra.mxu0 0.0
        %336 = vmatprep.subr.mxu0 0.0
        %337 = vmatpush1.msra.mxu0 0.0
        %338 = vmatprep.subr.mxu0 0.0
        %339 = vmatpush1.msra.mxu0 0.0
        %340 = vmatprep.subr.mxu0 0.0
        %341 = vmatpush1.msra.mxu0 0.0
        %342 = vmatprep.subr.mxu0 0.0
        %343 = vmatpush1.msra.mxu0 0.0
        %344 = vmatprep.subr.mxu0 0.0
        %345 = vmatpush1.msra.mxu0 0.0
        %346 = vmatprep.subr.mxu0 0.0
        %347 = vmatpush1.msra.mxu0 0.0
        %348 = vmatprep.subr.mxu0 0.0
        %349 = vmatpush1.msra.mxu0 0.0
        %350 = vmatprep.subr.mxu0 0.0
        %351 = vmatpush1.msra.mxu0 0.0
        %352 = vmatprep.subr.mxu0 0.0
        %353 = vmatpush1.msra.mxu0 0.0
        %354 = vmatprep.subr.mxu0 0.0
        %355 = vmatpush1.msra.mxu0 0.0
        %356 = vmatprep.subr.mxu0 0.0
        %357 = vmatpush1.msra.mxu0 0.0
        %358 = vmatprep.subr.mxu0 0.0
        %359 = vmatpush1.msra.mxu0 0.0
        %360 = vmatprep.subr.mxu0 0.0
        %361 = vmatpush1.msra.mxu0 0.0
        %362 = vmatprep.subr.mxu0 0.0
        %363 = vmatpush1.msra.mxu0 0.0
        %364 = vmatprep.subr.mxu0 0.0
        %365 = vmatpush1.msra.mxu0 0.0
        %366 = vmatprep.subr.mxu0 0.0
        %367 = vmatpush1.msra.mxu0 0.0
        %368 = vmatprep.subr.mxu0 0.0
        %369 = vmatpush1.msra.mxu0 0.0
        %370 = vmatprep.subr.mxu0 0.0
        %371 = vmatpush1.msra.mxu0 0.0
        %372 = vmatprep.subr.mxu0 0.0
        %373 = vmatpush1.msra.mxu0 0.0
        %374 = vmatprep.subr.mxu0 0.0
        %375 = vmatpush1.msra.mxu0 0.0
        %376 = vmatprep.subr.mxu0 0.0
        %377 = vmatpush1.msra.mxu0 0.0
        %378 = vmatprep.subr.mxu0 0.0
        %379 = vmatpush1.msra.mxu0 0.0
        %380 = vmatprep.subr.mxu0 0.0
        %381 = vmatpush1.msra.mxu0 0.0
        %382 = vmatprep.subr.mxu0 0.0
        %383 = vmatpush1.msra.mxu0 0.0
        %384 = vmatprep.subr.mxu0 0.0
        %385 = vmatpush1.msra.mxu0 0.0
        %386 = vmatprep.subr.mxu0 0.0
        %387 = vmatpush1.msra.mxu0 0.0
        %388 = vmatprep.mubr.f32.mxu0 0.0
        %389 = vmatmul.mubr.f32.gmra.mrb[0].mxu0 %v322
        %v390 = vpop.f32.mrb[0].mxu0
        %v391 = vadd.f32 %v320, %v390
        %v392 = vpop.f32.mrb[0].mxu0
        %393 = vdwg.mxu0
        %v394 = vlaneseq
        %v395 = vshrl.u32 %v394, 7
        %v396 = vlaneseq
        %v397 = vand.u32 %v396, 127
        %vm398 = vcmp.ge.s32.totalorder %v395, %v397
        %v399 = vsel %vm398, 0.0, -1e+30
        %v400 = vld [vmem:[#allocation7 + $0x8] sm:$0xff]
        %v401 = vld [vmem:[#allocation7 + $0x40] sm:$0xff]
        %v402 = vld [vmem:[#allocation7 + $0x78] sm:$0xff]
        %v403 = vld [vmem:[#allocation7 + $0xb0] sm:$0xff]
        %405 = vrot.lane.b32.xlu0 %v391, 96
        %v406 = vpop.permute.xlu0 %405
        %vm407 = vcmask 64512
        %v408 = vsel %vm407, %v391, 0
        %v410 = vsel %vm407, %v406, 0
        %412 = vmatprep.subr.mxu0 0.0
        %413 = vmatpush1.xpose.msra.mxu0 %v410
        %414 = vmatprep.subr.mxu0 0.0
        %415 = vmatpush1.xpose.msra.mxu0 0.0
        %416 = vmatprep.subr.mxu0 0.0
        %417 = vmatpush1.xpose.msra.mxu0 0.0
        %418 = vmatprep.subr.mxu0 0.0
        %419 = vmatpush1.xpose.msra.mxu0 0.0
        %420 = vmatprep.subr.mxu0 0.0
        %421 = vmatpush1.xpose.msra.mxu0 0.0
        %422 = vmatprep.subr.mxu0 0.0
        %423 = vmatpush1.xpose.msra.mxu0 0.0
        %424 = vmatprep.subr.mxu0 0.0
        %425 = vmatpush1.xpose.msra.mxu0 0.0
        %426 = vmatprep.subr.mxu0 0.0
        %427 = vmatpush1.xpose.msra.mxu0 0.0
        %428 = vmatprep.subr.mxu0 0.0
        %429 = vmatpush1.xpose.msra.mxu0 0.0
        %430 = vmatprep.subr.mxu0 0.0
        %431 = vmatpush1.xpose.msra.mxu0 0.0
        %432 = vmatprep.subr.mxu0 0.0
        %433 = vmatpush1.xpose.msra.mxu0 0.0
        %434 = vmatprep.subr.mxu0 0.0
        %435 = vmatpush1.xpose.msra.mxu0 0.0
        %436 = vmatprep.subr.mxu0 0.0
        %437 = vmatpush1.xpose.msra.mxu0 0.0
        %438 = vmatprep.subr.mxu0 0.0
        %439 = vmatpush1.xpose.msra.mxu0 0.0
        %440 = vmatprep.subr.mxu0 0.0
        %441 = vmatpush1.xpose.msra.mxu0 0.0
        %442 = vmatprep.subr.mxu0 0.0
        %443 = vmatpush1.xpose.msra.mxu0 0.0
        %444 = vmatprep.subr.mxu0 0.0
        %445 = vmatpush1.xpose.msra.mxu0 0.0
        %446 = vmatprep.subr.mxu0 0.0
        %447 = vmatpush1.xpose.msra.mxu0 0.0
        %448 = vmatprep.subr.mxu0 0.0
        %449 = vmatpush1.xpose.msra.mxu0 0.0
        %450 = vmatprep.subr.mxu0 0.0
        %451 = vmatpush1.xpose.msra.mxu0 0.0
        %452 = vmatprep.subr.mxu0 0.0
        %453 = vmatpush1.xpose.msra.mxu0 0.0
        %454 = vmatprep.subr.mxu0 0.0
        %455 = vmatpush1.xpose.msra.mxu0 0.0
        %456 = vmatprep.subr.mxu0 0.0
        %457 = vmatpush1.xpose.msra.mxu0 0.0
        %458 = vmatprep.subr.mxu0 0.0
        %459 = vmatpush1.xpose.msra.mxu0 0.0
        %460 = vmatprep.subr.mxu0 0.0
        %461 = vmatpush1.xpose.msra.mxu0 0.0
        %462 = vmatprep.subr.mxu0 0.0
        %463 = vmatpush1.xpose.msra.mxu0 0.0
        %464 = vmatprep.subr.mxu0 0.0
        %465 = vmatpush1.xpose.msra.mxu0 0.0
        %466 = vmatprep.subr.mxu0 0.0
        %467 = vmatpush1.xpose.msra.mxu0 0.0
        %468 = vmatprep.subr.mxu0 0.0
        %469 = vmatpush1.xpose.msra.mxu0 0.0
        %470 = vmatprep.subr.mxu0 0.0
        %471 = vmatpush1.xpose.msra.mxu0 0.0
        %472 = vmatprep.subr.mxu0 0.0
        %473 = vmatpush1.xpose.msra.mxu0 0.0
        %474 = vmatprep.subr.mxu0 0.0
        %475 = vmatpush1.xpose.msra.mxu0 0.0
        %476 = vmatprep.mubr.f32.mxu0 0.0
        %477 = vmatmul.mubr.f32.gmra.mrb[0].mxu0 %v408
        %v478 = vpop.f32.mrb[0].mxu0
        %v479 = vadd.f32 %v399, %v478
        %v480 = vpop.f32.mrb[0].mxu0
        %481 = vdwg.mxu0
        %v482 = vsel %vm407, %v479, -inf
        %483 = vmax.xlane.f32.xlu0 %v482
        %v484 = vpop.xlane.xlu0 %483
        %v485 = vsub.f32 %v479, %v484
        %v486 = vmul.f32 %v485, 1.442695
        %v487 = vpow.pop %v486
        %v488 = vsel %vm407, %v487, 0.0
        %489 = vadd.xlane.f32.xlu0 %v488
        %v490 = vpop.xlane.xlu0 %489
        %491 = vrot.lane.b32.xlu0 %v391, 64
        %v492 = vpop.permute.xlu0 %491
        %v495 = vsel %vm407, %v487, 0
        %497 = vmatprep.subr.mxu0 0.0
        %498 = vmatpush1.msra.mxu0 %v492
        %499 = vmatprep.subr.mxu0 0.0
        %500 = vmatpush1.msra.mxu0 0.0
        %501 = vmatprep.subr.mxu0 0.0
        %502 = vmatpush1.msra.mxu0 0.0
        %503 = vmatprep.subr.mxu0 0.0
        %504 = vmatpush1.msra.mxu0 0.0
        %505 = vmatprep.subr.mxu0 0.0
        %506 = vmatpush1.msra.mxu0 0.0
        %507 = vmatprep.subr.mxu0 0.0
        %508 = vmatpush1.msra.mxu0 0.0
        %509 = vmatprep.subr.mxu0 0.0
        %510 = vmatpush1.msra.mxu0 0.0
        %511 = vmatprep.subr.mxu0 0.0
        %512 = vmatpush1.msra.mxu0 0.0
        %513 = vmatprep.subr.mxu0 0.0
        %514 = vmatpush1.msra.mxu0 0.0
        %515 = vmatprep.subr.mxu0 0.0
        %516 = vmatpush1.msra.mxu0 0.0
        %517 = vmatprep.subr.mxu0 0.0
        %518 = vmatpush1.msra.mxu0 0.0
        %519 = vmatprep.subr.mxu0 0.0
        %520 = vmatpush1.msra.mxu0 0.0
        %521 = vmatprep.subr.mxu0 0.0
        %522 = vmatpush1.msra.mxu0 0.0
        %523 = vmatprep.subr.mxu0 0.0
        %524 = vmatpush1.msra.mxu0 0.0
        %525 = vmatprep.subr.mxu0 0.0
        %526 = vmatpush1.msra.mxu0 0.0
        %527 = vmatprep.subr.mxu0 0.0
        %528 = vmatpush1.msra.mxu0 0.0
        %529 = vmatprep.subr.mxu0 0.0
        %530 = vmatpush1.msra.mxu0 0.0
        %531 = vmatprep.subr.mxu0 0.0
        %532 = vmatpush1.msra.mxu0 0.0
        %533 = vmatprep.subr.mxu0 0.0
        %534 = vmatpush1.msra.mxu0 0.0
        %535 = vmatprep.subr.mxu0 0.0
        %536 = vmatpush1.msra.mxu0 0.0
        %537 = vmatprep.subr.mxu0 0.0
        %538 = vmatpush1.msra.mxu0 0.0
        %539 = vmatprep.subr.mxu0 0.0
        %540 = vmatpush1.msra.mxu0 0.0
        %541 = vmatprep.subr.mxu0 0.0
        %542 = vmatpush1.msra.mxu0 0.0
        %543 = vmatprep.subr.mxu0 0.0
        %544 = vmatpush1.msra.mxu0 0.0
        %545 = vmatprep.subr.mxu0 0.0
        %546 = vmatpush1.msra.mxu0 0.0
        %547 = vmatprep.subr.mxu0 0.0
        %548 = vmatpush1.msra.mxu0 0.0
        %549 = vmatprep.subr.mxu0 0.0
        %550 = vmatpush1.msra.mxu0 0.0
        %551 = vmatprep.subr.mxu0 0.0
        %552 = vmatpush1.msra.mxu0 0.0
        %553 = vmatprep.subr.mxu0 0.0
        %554 = vmatpush1.msra.mxu0 0.0
        %555 = vmatprep.subr.mxu0 0.0
        %556 = vmatpush1.msra.mxu0 0.0
        %557 = vmatprep.subr.mxu0 0.0
        %558 = vmatpush1.msra.mxu0 0.0
        %559 = vmatprep.subr.mxu0 0.0
        %560 = vmatpush1.msra.mxu0 0.0
        %561 = vmatprep.mubr.f32.mxu0 0.0
        %562 = vmatmul.mubr.f32.gmra.mrb[0].mxu0 %v495
        %v563 = vpop.f32.mrb[0].mxu0
        %v564 = vadd.f32 0.0, %v563
        %v565 = vpop.f32.mrb[0].mxu0
        %566 = vdwg.mxu0
        %v567 = vrcp.pop %v490
        %v568 = vmul.f32 %v564, %v567
        %569 = vrot.lane.b32.xlu0 %v391, 120
        %v570 = vpop.permute.xlu0 %569
        %571 = vrot.lane.b32.xlu0 %v391, 88
        %v572 = vpop.permute.xlu0 %571
        %v573 = vsel %vm407, %v570, 0
        %v575 = vsel %vm407, %v572, 0
        %577 = vmatprep.subr.mxu0 0.0
        %578 = vmatpush1.xpose.msra.mxu0 %v575
        %579 = vmatprep.subr.mxu0 0.0
        %580 = vmatpush1.xpose.msra.mxu0 0.0
        %581 = vmatprep.subr.mxu0 0.0
        %582 = vmatpush1.xpose.msra.mxu0 0.0
        %583 = vmatprep.subr.mxu0 0.0
        %584 = vmatpush1.xpose.msra.mxu0 0.0
        %585 = vmatprep.subr.mxu0 0.0
        %586 = vmatpush1.xpose.msra.mxu0 0.0
        %587 = vmatprep.subr.mxu0 0.0
        %588 = vmatpush1.xpose.msra.mxu0 0.0
        %589 = vmatprep.subr.mxu0 0.0
        %590 = vmatpush1.xpose.msra.mxu0 0.0
        %591 = vmatprep.subr.mxu0 0.0
        %592 = vmatpush1.xpose.msra.mxu0 0.0
        %593 = vmatprep.subr.mxu0 0.0
        %594 = vmatpush1.xpose.msra.mxu0 0.0
        %595 = vmatprep.subr.mxu0 0.0
        %596 = vmatpush1.xpose.msra.mxu0 0.0
        %597 = vmatprep.subr.mxu0 0.0
        %598 = vmatpush1.xpose.msra.mxu0 0.0
        %599 = vmatprep.subr.mxu0 0.0
        %600 = vmatpush1.xpose.msra.mxu0 0.0
        %601 = vmatprep.subr.mxu0 0.0
        %602 = vmatpush1.xpose.msra.mxu0 0.0
        %603 = vmatprep.subr.mxu0 0.0
        %604 = vmatpush1.xpose.msra.mxu0 0.0
        %605 = vmatprep.subr.mxu0 0.0
        %606 = vmatpush1.xpose.msra.mxu0 0.0
        %607 = vmatprep.subr.mxu0 0.0
        %608 = vmatpush1.xpose.msra.mxu0 0.0
        %609 = vmatprep.subr.mxu0 0.0
        %610 = vmatpush1.xpose.msra.mxu0 0.0
        %611 = vmatprep.subr.mxu0 0.0
        %612 = vmatpush1.xpose.msra.mxu0 0.0
        %613 = vmatprep.subr.mxu0 0.0
        %614 = vmatpush1.xpose.msra.mxu0 0.0
        %615 = vmatprep.subr.mxu0 0.0
        %616 = vmatpush1.xpose.msra.mxu0 0.0
        %617 = vmatprep.subr.mxu0 0.0
        %618 = vmatpush1.xpose.msra.mxu0 0.0
        %619 = vmatprep.subr.mxu0 0.0
        %620 = vmatpush1.xpose.msra.mxu0 0.0
        %621 = vmatprep.subr.mxu0 0.0
        %622 = vmatpush1.xpose.msra.mxu0 0.0
        %623 = vmatprep.subr.mxu0 0.0
        %624 = vmatpush1.xpose.msra.mxu0 0.0
        %625 = vmatprep.subr.mxu0 0.0
        %626 = vmatpush1.xpose.msra.mxu0 0.0
        %627 = vmatprep.subr.mxu0 0.0
        %628 = vmatpush1.xpose.msra.mxu0 0.0
        %629 = vmatprep.subr.mxu0 0.0
        %630 = vmatpush1.xpose.msra.mxu0 0.0
        %631 = vmatprep.subr.mxu0 0.0
        %632 = vmatpush1.xpose.msra.mxu0 0.0
        %633 = vmatprep.subr.mxu0 0.0
        %634 = vmatpush1.xpose.msra.mxu0 0.0
        %635 = vmatprep.subr.mxu0 0.0
        %636 = vmatpush1.xpose.msra.mxu0 0.0
        %637 = vmatprep.subr.mxu0 0.0
        %638 = vmatpush1.xpose.msra.mxu0 0.0
        %639 = vmatprep.subr.mxu0 0.0
        %640 = vmatpush1.xpose.msra.mxu0 0.0
        %641 = vmatprep.mubr.f32.mxu0 0.0
        %642 = vmatmul.mubr.f32.gmra.mrb[0].mxu0 %v573
        %v643 = vpop.f32.mrb[0].mxu0
        %v644 = vadd.f32 %v399, %v643
        %v645 = vpop.f32.mrb[0].mxu0
        %646 = vdwg.mxu0
        %v647 = vsel %vm407, %v644, -inf
        %648 = vmax.xlane.f32.xlu0 %v647
        %v649 = vpop.xlane.xlu0 %648
        %v650 = vsub.f32 %v644, %v649
        %v651 = vmul.f32 %v650, 1.442695
        %v652 = vpow.pop %v651
        %v653 = vsel %vm407, %v652, 0.0
        %654 = vadd.xlane.f32.xlu0 %v653
        %v655 = vpop.xlane.xlu0 %654
        %656 = vrot.lane.b32.xlu0 %v391, 56
        %v657 = vpop.permute.xlu0 %656
        %v660 = vsel %vm407, %v652, 0
        %662 = vmatprep.subr.mxu0 0.0
        %663 = vmatpush1.msra.mxu0 %v657
        %664 = vmatprep.subr.mxu0 0.0
        %665 = vmatpush1.msra.mxu0 0.0
        %666 = vmatprep.subr.mxu0 0.0
        %667 = vmatpush1.msra.mxu0 0.0
        %668 = vmatprep.subr.mxu0 0.0
        %669 = vmatpush1.msra.mxu0 0.0
        %670 = vmatprep.subr.mxu0 0.0
        %671 = vmatpush1.msra.mxu0 0.0
        %672 = vmatprep.subr.mxu0 0.0
        %673 = vmatpush1.msra.mxu0 0.0
        %674 = vmatprep.subr.mxu0 0.0
        %675 = vmatpush1.msra.mxu0 0.0
        %676 = vmatprep.subr.mxu0 0.0
        %677 = vmatpush1.msra.mxu0 0.0
        %678 = vmatprep.subr.mxu0 0.0
        %679 = vmatpush1.msra.mxu0 0.0
        %680 = vmatprep.subr.mxu0 0.0
        %681 = vmatpush1.msra.mxu0 0.0
        %682 = vmatprep.subr.mxu0 0.0
        %683 = vmatpush1.msra.mxu0 0.0
        %684 = vmatprep.subr.mxu0 0.0
        %685 = vmatpush1.msra.mxu0 0.0
        %686 = vmatprep.subr.mxu0 0.0
        %687 = vmatpush1.msra.mxu0 0.0
        %688 = vmatprep.subr.mxu0 0.0
        %689 = vmatpush1.msra.mxu0 0.0
        %690 = vmatprep.subr.mxu0 0.0
        %691 = vmatpush1.msra.mxu0 0.0
        %692 = vmatprep.subr.mxu0 0.0
        %693 = vmatpush1.msra.mxu0 0.0
        %694 = vmatprep.subr.mxu0 0.0
        %695 = vmatpush1.msra.mxu0 0.0
        %696 = vmatprep.subr.mxu0 0.0
        %697 = vmatpush1.msra.mxu0 0.0
        %698 = vmatprep.subr.mxu0 0.0
        %699 = vmatpush1.msra.mxu0 0.0
        %700 = vmatprep.subr.mxu0 0.0
        %701 = vmatpush1.msra.mxu0 0.0
        %702 = vmatprep.subr.mxu0 0.0
        %703 = vmatpush1.msra.mxu0 0.0
        %704 = vmatprep.subr.mxu0 0.0
        %705 = vmatpush1.msra.mxu0 0.0
        %706 = vmatprep.subr.mxu0 0.0
        %707 = vmatpush1.msra.mxu0 0.0
        %708 = vmatprep.subr.mxu0 0.0
        %709 = vmatpush1.msra.mxu0 0.0
        %710 = vmatprep.subr.mxu0 0.0
        %711 = vmatpush1.msra.mxu0 0.0
        %712 = vmatprep.subr.mxu0 0.0
        %713 = vmatpush1.msra.mxu0 0.0
        %714 = vmatprep.subr.mxu0 0.0
        %715 = vmatpush1.msra.mxu0 0.0
        %716 = vmatprep.subr.mxu0 0.0
        %717 = vmatpush1.msra.mxu0 0.0
        %718 = vmatprep.subr.mxu0 0.0
        %719 = vmatpush1.msra.mxu0 0.0
        %720 = vmatprep.subr.mxu0 0.0
        %721 = vmatpush1.msra.mxu0 0.0
        %722 = vmatprep.subr.mxu0 0.0
        %723 = vmatpush1.msra.mxu0 0.0
        %724 = vmatprep.subr.mxu0 0.0
        %725 = vmatpush1.msra.mxu0 0.0
        %726 = vmatprep.mubr.f32.mxu0 0.0
        %727 = vmatmul.mubr.f32.gmra.mrb[0].mxu0 %v660
        %v728 = vpop.f32.mrb[0].mxu0
        %v729 = vadd.f32 0.0, %v728
        %v730 = vpop.f32.mrb[0].mxu0
        %731 = vdwg.mxu0
        %v732 = vrcp.pop %v655
        %v733 = vmul.f32 %v729, %v732
        %734 = vrot.lane.b32.xlu0 %v391, 112
        %v735 = vpop.permute.xlu0 %734
        %736 = vrot.lane.b32.xlu0 %v391, 80
        %v737 = vpop.permute.xlu0 %736
        %v738 = vsel %vm407, %v735, 0
        %v740 = vsel %vm407, %v737, 0
        %742 = vmatprep.subr.mxu0 0.0
        %743 = vmatpush1.xpose.msra.mxu0 %v740
        %744 = vmatprep.subr.mxu0 0.0
        %745 = vmatpush1.xpose.msra.mxu0 0.0
        %746 = vmatprep.subr.mxu0 0.0
        %747 = vmatpush1.xpose.msra.mxu0 0.0
        %748 = vmatprep.subr.mxu0 0.0
        %749 = vmatpush1.xpose.msra.mxu0 0.0
        %750 = vmatprep.subr.mxu0 0.0
        %751 = vmatpush1.xpose.msra.mxu0 0.0
        %752 = vmatprep.subr.mxu0 0.0
        %753 = vmatpush1.xpose.msra.mxu0 0.0
        %754 = vmatprep.subr.mxu0 0.0
        %755 = vmatpush1.xpose.msra.mxu0 0.0
        %756 = vmatprep.subr.mxu0 0.0
        %757 = vmatpush1.xpose.msra.mxu0 0.0
        %758 = vmatprep.subr.mxu0 0.0
        %759 = vmatpush1.xpose.msra.mxu0 0.0
        %760 = vmatprep.subr.mxu0 0.0
        %761 = vmatpush1.xpose.msra.mxu0 0.0
        %762 = vmatprep.subr.mxu0 0.0
        %763 = vmatpush1.xpose.msra.mxu0 0.0
        %764 = vmatprep.subr.mxu0 0.0
        %765 = vmatpush1.xpose.msra.mxu0 0.0
        %766 = vmatprep.subr.mxu0 0.0
        %767 = vmatpush1.xpose.msra.mxu0 0.0
        %768 = vmatprep.subr.mxu0 0.0
        %769 = vmatpush1.xpose.msra.mxu0 0.0
        %770 = vmatprep.subr.mxu0 0.0
        %771 = vmatpush1.xpose.msra.mxu0 0.0
        %772 = vmatprep.subr.mxu0 0.0
        %773 = vmatpush1.xpose.msra.mxu0 0.0
        %774 = vmatprep.subr.mxu0 0.0
        %775 = vmatpush1.xpose.msra.mxu0 0.0
        %776 = vmatprep.subr.mxu0 0.0
        %777 = vmatpush1.xpose.msra.mxu0 0.0
        %778 = vmatprep.subr.mxu0 0.0
        %779 = vmatpush1.xpose.msra.mxu0 0.0
        %780 = vmatprep.subr.mxu0 0.0
        %781 = vmatpush1.xpose.msra.mxu0 0.0
        %782 = vmatprep.subr.mxu0 0.0
        %783 = vmatpush1.xpose.msra.mxu0 0.0
        %784 = vmatprep.subr.mxu0 0.0
        %785 = vmatpush1.xpose.msra.mxu0 0.0
        %786 = vmatprep.subr.mxu0 0.0
        %787 = vmatpush1.xpose.msra.mxu0 0.0
        %788 = vmatprep.subr.mxu0 0.0
        %789 = vmatpush1.xpose.msra.mxu0 0.0
        %790 = vmatprep.subr.mxu0 0.0
        %791 = vmatpush1.xpose.msra.mxu0 0.0
        %792 = vmatprep.subr.mxu0 0.0
        %793 = vmatpush1.xpose.msra.mxu0 0.0
        %794 = vmatprep.subr.mxu0 0.0
        %795 = vmatpush1.xpose.msra.mxu0 0.0
        %796 = vmatprep.subr.mxu0 0.0
        %797 = vmatpush1.xpose.msra.mxu0 0.0
        %798 = vmatprep.subr.mxu0 0.0
        %799 = vmatpush1.xpose.msra.mxu0 0.0
        %800 = vmatprep.subr.mxu0 0.0
        %801 = vmatpush1.xpose.msra.mxu0 0.0
        %802 = vmatprep.subr.mxu0 0.0
        %803 = vmatpush1.xpose.msra.mxu0 0.0
        %804 = vmatprep.subr.mxu0 0.0
        %805 = vmatpush1.xpose.msra.mxu0 0.0
        %806 = vmatprep.mubr.f32.mxu0 0.0
        %807 = vmatmul.mubr.f32.gmra.mrb[0].mxu0 %v738
        %v808 = vpop.f32.mrb[0].mxu0
        %v809 = vadd.f32 %v399, %v808
        %v810 = vpop.f32.mrb[0].mxu0
        %811 = vdwg.mxu0
        %v812 = vsel %vm407, %v809, -inf
        %813 = vmax.xlane.f32.xlu0 %v812
        %v814 = vpop.xlane.xlu0 %813
        %v815 = vsub.f32 %v809, %v814
        %v816 = vmul.f32 %v815, 1.442695
        %v817 = vpow.pop %v816
        %v818 = vsel %vm407, %v817, 0.0
        %819 = vadd.xlane.f32.xlu0 %v818
        %v820 = vpop.xlane.xlu0 %819
        %821 = vrot.lane.b32.xlu0 %v391, 48
        %v822 = vpop.permute.xlu0 %821
        %v825 = vsel %vm407, %v817, 0
        %827 = vmatprep.subr.mxu0 0.0
        %828 = vmatpush1.msra.mxu0 %v822
        %829 = vmatprep.subr.mxu0 0.0
        %830 = vmatpush1.msra.mxu0 0.0
        %831 = vmatprep.subr.mxu0 0.0
        %832 = vmatpush1.msra.mxu0 0.0
        %833 = vmatprep.subr.mxu0 0.0
        %834 = vmatpush1.msra.mxu0 0.0
        %835 = vmatprep.subr.mxu0 0.0
        %836 = vmatpush1.msra.mxu0 0.0
        %837 = vmatprep.subr.mxu0 0.0
        %838 = vmatpush1.msra.mxu0 0.0
        %839 = vmatprep.subr.mxu0 0.0
        %840 = vmatpush1.msra.mxu0 0.0
        %841 = vmatprep.subr.mxu0 0.0
        %842 = vmatpush1.msra.mxu0 0.0
        %843 = vmatprep.subr.mxu0 0.0
        %844 = vmatpush1.msra.mxu0 0.0
        %845 = vmatprep.subr.mxu0 0.0
        %846 = vmatpush1.msra.mxu0 0.0
        %847 = vmatprep.subr.mxu0 0.0
        %848 = vmatpush1.msra.mxu0 0.0
        %849 = vmatprep.subr.mxu0 0.0
        %850 = vmatpush1.msra.mxu0 0.0
        %851 = vmatprep.subr.mxu0 0.0
        %852 = vmatpush1.msra.mxu0 0.0
        %853 = vmatprep.subr.mxu0 0.0
        %854 = vmatpush1.msra.mxu0 0.0
        %855 = vmatprep.subr.mxu0 0.0
        %856 = vmatpush1.msra.mxu0 0.0
        %857 = vmatprep.subr.mxu0 0.0
        %858 = vmatpush1.msra.mxu0 0.0
        %859 = vmatprep.subr.mxu0 0.0
        %860 = vmatpush1.msra.mxu0 0.0
        %861 = vmatprep.subr.mxu0 0.0
        %862 = vmatpush1.msra.mxu0 0.0
        %863 = vmatprep.subr.mxu0 0.0
        %864 = vmatpush1.msra.mxu0 0.0
        %865 = vmatprep.subr.mxu0 0.0
        %866 = vmatpush1.msra.mxu0 0.0
        %867 = vmatprep.subr.mxu0 0.0
        %868 = vmatpush1.msra.mxu0 0.0
        %869 = vmatprep.subr.mxu0 0.0
        %870 = vmatpush1.msra.mxu0 0.0
        %871 = vmatprep.subr.mxu0 0.0
        %872 = vmatpush1.msra.mxu0 0.0
        %873 = vmatprep.subr.mxu0 0.0
        %874 = vmatpush1.msra.mxu0 0.0
        %875 = vmatprep.subr.mxu0 0.0
        %876 = vmatpush1.msra.mxu0 0.0
        %877 = vmatprep.subr.mxu0 0.0
        %878 = vmatpush1.msra.mxu0 0.0
        %879 = vmatprep.subr.mxu0 0.0
        %880 = vmatpush1.msra.mxu0 0.0
        %881 = vmatprep.subr.mxu0 0.0
        %882 = vmatpush1.msra.mxu0 0.0
        %883 = vmatprep.subr.mxu0 0.0
        %884 = vmatpush1.msra.mxu0 0.0
        %885 = vmatprep.subr.mxu0 0.0
        %886 = vmatpush1.msra.mxu0 0.0
        %887 = vmatprep.subr.mxu0 0.0
        %888 = vmatpush1.msra.mxu0 0.0
        %889 = vmatprep.subr.mxu0 0.0
        %890 = vmatpush1.msra.mxu0 0.0
        %891 = vmatprep.mubr.f32.mxu0 0.0
        %892 = vmatmul.mubr.f32.gmra.mrb[0].mxu0 %v825
        %v893 = vpop.f32.mrb[0].mxu0
        %v894 = vadd.f32 0.0, %v893
        %v895 = vpop.f32.mrb[0].mxu0
        %896 = vdwg.mxu0
        %v897 = vrcp.pop %v820
        %v898 = vmul.f32 %v894, %v897
        %899 = vrot.lane.b32.xlu0 %v391, 104
        %v900 = vpop.permute.xlu0 %899
        %901 = vrot.lane.b32.xlu0 %v391, 72
        %v902 = vpop.permute.xlu0 %901
        %v903 = vsel %vm407, %v900, 0
        %v905 = vsel %vm407, %v902, 0
        %907 = vmatprep.subr.mxu0 0.0
        %908 = vmatpush1.xpose.msra.mxu0 %v905
        %909 = vmatprep.subr.mxu0 0.0
        %910 = vmatpush1.xpose.msra.mxu0 0.0
        %911 = vmatprep.subr.mxu0 0.0
        %912 = vmatpush1.xpose.msra.mxu0 0.0
        %913 = vmatprep.subr.mxu0 0.0
        %914 = vmatpush1.xpose.msra.mxu0 0.0
        %915 = vmatprep.subr.mxu0 0.0
        %916 = vmatpush1.xpose.msra.mxu0 0.0
        %917 = vmatprep.subr.mxu0 0.0
        %918 = vmatpush1.xpose.msra.mxu0 0.0
        %919 = vmatprep.subr.mxu0 0.0
        %920 = vmatpush1.xpose.msra.mxu0 0.0
        %921 = vmatprep.subr.mxu0 0.0
        %922 = vmatpush1.xpose.msra.mxu0 0.0
        %923 = vmatprep.subr.mxu0 0.0
        %924 = vmatpush1.xpose.msra.mxu0 0.0
        %925 = vmatprep.subr.mxu0 0.0
        %926 = vmatpush1.xpose.msra.mxu0 0.0
        %927 = vmatprep.subr.mxu0 0.0
        %928 = vmatpush1.xpose.msra.mxu0 0.0
        %929 = vmatprep.subr.mxu0 0.0
        %930 = vmatpush1.xpose.msra.mxu0 0.0
        %931 = vmatprep.subr.mxu0 0.0
        %932 = vmatpush1.xpose.msra.mxu0 0.0
        %933 = vmatprep.subr.mxu0 0.0
        %934 = vmatpush1.xpose.msra.mxu0 0.0
        %935 = vmatprep.subr.mxu0 0.0
        %936 = vmatpush1.xpose.msra.mxu0 0.0
        %937 = vmatprep.subr.mxu0 0.0
        %938 = vmatpush1.xpose.msra.mxu0 0.0
        %939 = vmatprep.subr.mxu0 0.0
        %940 = vmatpush1.xpose.msra.mxu0 0.0
        %941 = vmatprep.subr.mxu0 0.0
        %942 = vmatpush1.xpose.msra.mxu0 0.0
        %943 = vmatprep.subr.mxu0 0.0
        %944 = vmatpush1.xpose.msra.mxu0 0.0
        %945 = vmatprep.subr.mxu0 0.0
        %946 = vmatpush1.xpose.msra.mxu0 0.0
        %947 = vmatprep.subr.mxu0 0.0
        %948 = vmatpush1.xpose.msra.mxu0 0.0
        %949 = vmatprep.subr.mxu0 0.0
        %950 = vmatpush1.xpose.msra.mxu0 0.0
        %951 = vmatprep.subr.mxu0 0.0
        %952 = vmatpush1.xpose.msra.mxu0 0.0
        %953 = vmatprep.subr.mxu0 0.0
        %954 = vmatpush1.xpose.msra.mxu0 0.0
        %955 = vmatprep.subr.mxu0 0.0
        %956 = vmatpush1.xpose.msra.mxu0 0.0
        %957 = vmatprep.subr.mxu0 0.0
        %958 = vmatpush1.xpose.msra.mxu0 0.0
        %959 = vmatprep.subr.mxu0 0.0
        %960 = vmatpush1.xpose.msra.mxu0 0.0
        %961 = vmatprep.subr.mxu0 0.0
        %962 = vmatpush1.xpose.msra.mxu0 0.0
        %963 = vmatprep.subr.mxu0 0.0
        %964 = vmatpush1.xpose.msra.mxu0 0.0
        %965 = vmatprep.subr.mxu0 0.0
        %966 = vmatpush1.xpose.msra.mxu0 0.0
        %967 = vmatprep.subr.mxu0 0.0
        %968 = vmatpush1.xpose.msra.mxu0 0.0
        %969 = vmatprep.subr.mxu0 0.0
        %970 = vmatpush1.xpose.msra.mxu0 0.0
        %971 = vmatprep.mubr.f32.mxu0 0.0
        %972 = vmatmul.mubr.f32.gmra.mrb[0].mxu0 %v903
        %v973 = vpop.f32.mrb[0].mxu0
        %v974 = vadd.f32 %v399, %v973
        %v975 = vpop.f32.mrb[0].mxu0
        %976 = vdwg.mxu0
        %v977 = vsel %vm407, %v974, -inf
        %978 = vmax.xlane.f32.xlu0 %v977
        %v979 = vpop.xlane.xlu0 %978
        %v980 = vsub.f32 %v974, %v979
        %v981 = vmul.f32 %v980, 1.442695
        %v982 = vpow.pop %v981
        %v983 = vsel %vm407, %v982, 0.0
        %984 = vadd.xlane.f32.xlu0 %v983
        %v985 = vpop.xlane.xlu0 %984
        %986 = vrot.lane.b32.xlu0 %v391, 40
        %v987 = vpop.permute.xlu0 %986
        %v990 = vsel %vm407, %v982, 0
        %992 = vmatprep.subr.mxu0 0.0
        %993 = vmatpush1.msra.mxu0 %v987
        %994 = vmatprep.subr.mxu0 0.0
        %995 = vmatpush1.msra.mxu0 0.0
        %996 = vmatprep.subr.mxu0 0.0
        %997 = vmatpush1.msra.mxu0 0.0
        %998 = vmatprep.subr.mxu0 0.0
        %999 = vmatpush1.msra.mxu0 0.0
        %1000 = vmatprep.subr.mxu0 0.0
        %1001 = vmatpush1.msra.mxu0 0.0
        %1002 = vmatprep.subr.mxu0 0.0
        %1003 = vmatpush1.msra.mxu0 0.0
        %1004 = vmatprep.subr.mxu0 0.0
        %1005 = vmatpush1.msra.mxu0 0.0
        %1006 = vmatprep.subr.mxu0 0.0
        %1007 = vmatpush1.msra.mxu0 0.0
        %1008 = vmatprep.subr.mxu0 0.0
        %1009 = vmatpush1.msra.mxu0 0.0
        %1010 = vmatprep.subr.mxu0 0.0
        %1011 = vmatpush1.msra.mxu0 0.0
        %1012 = vmatprep.subr.mxu0 0.0
        %1013 = vmatpush1.msra.mxu0 0.0
        %1014 = vmatprep.subr.mxu0 0.0
        %1015 = vmatpush1.msra.mxu0 0.0
        %1016 = vmatprep.subr.mxu0 0.0
        %1017 = vmatpush1.msra.mxu0 0.0
        %1018 = vmatprep.subr.mxu0 0.0
        %1019 = vmatpush1.msra.mxu0 0.0
        %1020 = vmatprep.subr.mxu0 0.0
        %1021 = vmatpush1.msra.mxu0 0.0
        %1022 = vmatprep.subr.mxu0 0.0
        %1023 = vmatpush1.msra.mxu0 0.0
        %1024 = vmatprep.subr.mxu0 0.0
        %1025 = vmatpush1.msra.mxu0 0.0
        %1026 = vmatprep.subr.mxu0 0.0
        %1027 = vmatpush1.msra.mxu0 0.0
        %1028 = vmatprep.subr.mxu0 0.0
        %1029 = vmatpush1.msra.mxu0 0.0
        %1030 = vmatprep.subr.mxu0 0.0
        %1031 = vmatpush1.msra.mxu0 0.0
        %1032 = vmatprep.subr.mxu0 0.0
        %1033 = vmatpush1.msra.mxu0 0.0
        %1034 = vmatprep.subr.mxu0 0.0
        %1035 = vmatpush1.msra.mxu0 0.0
        %1036 = vmatprep.subr.mxu0 0.0
        %1037 = vmatpush1.msra.mxu0 0.0
        %1038 = vmatprep.subr.mxu0 0.0
        %1039 = vmatpush1.msra.mxu0 0.0
        %1040 = vmatprep.subr.mxu0 0.0
        %1041 = vmatpush1.msra.mxu0 0.0
        %1042 = vmatprep.subr.mxu0 0.0
        %1043 = vmatpush1.msra.mxu0 0.0
        %1044 = vmatprep.subr.mxu0 0.0
        %1045 = vmatpush1.msra.mxu0 0.0
        %1046 = vmatprep.subr.mxu0 0.0
        %1047 = vmatpush1.msra.mxu0 0.0
        %1048 = vmatprep.subr.mxu0 0.0
        %1049 = vmatpush1.msra.mxu0 0.0
        %1050 = vmatprep.subr.mxu0 0.0
        %1051 = vmatpush1.msra.mxu0 0.0
        %1052 = vmatprep.subr.mxu0 0.0
        %1053 = vmatpush1.msra.mxu0 0.0
        %1054 = vmatprep.subr.mxu0 0.0
        %1055 = vmatpush1.msra.mxu0 0.0
        %1056 = vmatprep.mubr.f32.mxu0 0.0
        %1057 = vmatmul.mubr.f32.gmra.mrb[0].mxu0 %v990
        %v1058 = vpop.f32.mrb[0].mxu0
        %v1059 = vadd.f32 0.0, %v1058
        %v1060 = vpop.f32.mrb[0].mxu0
        %1061 = vdwg.mxu0
        %v1062 = vrcp.pop %v985
        %v1063 = vmul.f32 %v1059, %v1062
        %1065 = vrot.lane.b32.xlu0 %v733, 8
        %v1066 = vpop.permute.xlu0 %1065
        %1069 = vrot.lane.b32.xlu0 %v898, 16
        %v1070 = vpop.permute.xlu0 %1069
        %1073 = vrot.lane.b32.xlu0 %v1063, 24
        %v1074 = vpop.permute.xlu0 %1073
        %v1076 = vsel %vm407, %v568, %v1066
        %vm1077 = vcmask 130048
        %v1078 = vsel %vm1077, %v1076, %v1070
        %vm1079 = vcmask 195584
        %v1080 = vsel %vm1079, %v1078, %v1074
        %v1082 = vsel %vm287, %v1080, 0
        %1084 = vmatprep.subr.mxu0 0.0
        %1085 = vmatpush1.msra.mxu0 %v400
        %1086 = vmatprep.subr.mxu0 0.0
        %1087 = vmatpush1.msra.mxu0 %v401
        %1088 = vmatprep.subr.mxu0 0.0
        %1089 = vmatpush1.msra.mxu0 %v402
        %1090 = vmatprep.subr.mxu0 0.0
        %1091 = vmatpush1.msra.mxu0 %v403
        %1092 = vmatprep.subr.mxu0 0.0
        %1093 = vmatpush1.msra.mxu0 0.0
        %1094 = vmatprep.subr.mxu0 0.0
        %1095 = vmatpush1.msra.mxu0 0.0
        %1096 = vmatprep.subr.mxu0 0.0
        %1097 = vmatpush1.msra.mxu0 0.0
        %1098 = vmatprep.subr.mxu0 0.0
        %1099 = vmatpush1.msra.mxu0 0.0
        %1100 = vmatprep.subr.mxu0 0.0
        %1101 = vmatpush1.msra.mxu0 0.0
        %1102 = vmatprep.subr.mxu0 0.0
        %1103 = vmatpush1.msra.mxu0 0.0
        %1104 = vmatprep.subr.mxu0 0.0
        %1105 = vmatpush1.msra.mxu0 0.0
        %1106 = vmatprep.subr.mxu0 0.0
        %1107 = vmatpush1.msra.mxu0 0.0
        %1108 = vmatprep.subr.mxu0 0.0
        %1109 = vmatpush1.msra.mxu0 0.0
        %1110 = vmatprep.subr.mxu0 0.0
        %1111 = vmatpush1.msra.mxu0 0.0
        %1112 = vmatprep.subr.mxu0 0.0
        %1113 = vmatpush1.msra.mxu0 0.0
        %1114 = vmatprep.subr.mxu0 0.0
        %1115 = vmatpush1.msra.mxu0 0.0
        %1116 = vmatprep.subr.mxu0 0.0
        %1117 = vmatpush1.msra.mxu0 0.0
        %1118 = vmatprep.subr.mxu0 0.0
        %1119 = vmatpush1.msra.mxu0 0.0
        %1120 = vmatprep.subr.mxu0 0.0
        %1121 = vmatpush1.msra.mxu0 0.0
        %1122 = vmatprep.subr.mxu0 0.0
        %1123 = vmatpush1.msra.mxu0 0.0
        %1124 = vmatprep.subr.mxu0 0.0
        %1125 = vmatpush1.msra.mxu0 0.0
        %1126 = vmatprep.subr.mxu0 0.0
        %1127 = vmatpush1.msra.mxu0 0.0
        %1128 = vmatprep.subr.mxu0 0.0
        %1129 = vmatpush1.msra.mxu0 0.0
        %1130 = vmatprep.subr.mxu0 0.0
        %1131 = vmatpush1.msra.mxu0 0.0
        %1132 = vmatprep.subr.mxu0 0.0
        %1133 = vmatpush1.msra.mxu0 0.0
        %1134 = vmatprep.subr.mxu0 0.0
        %1135 = vmatpush1.msra.mxu0 0.0
        %1136 = vmatprep.subr.mxu0 0.0
        %1137 = vmatpush1.msra.mxu0 0.0
        %1138 = vmatprep.subr.mxu0 0.0
        %1139 = vmatpush1.msra.mxu0 0.0
        %1140 = vmatprep.subr.mxu0 0.0
        %1141 = vmatpush1.msra.mxu0 0.0
        %1142 = vmatprep.subr.mxu0 0.0
        %1143 = vmatpush1.msra.mxu0 0.0
        %1144 = vmatprep.subr.mxu0 0.0
        %1145 = vmatpush1.msra.mxu0 0.0
        %1146 = vmatprep.subr.mxu0 0.0
        %1147 = vmatpush1.msra.mxu0 0.0
        %1148 = vmatprep.mubr.f32.mxu0 0.0
        %1149 = vmatmul.mubr.f32.gmra.mrb[0].mxu0 %v1082
        %v1150 = vpop.f32.mrb[0].mxu0
        %v1151 = vadd.f32 0.0, %v1150
        %v1152 = vpop.f32.mrb[0].mxu0
        %1153 = vdwg.mxu0
        %v1154 = vadd.f32 %v282, %v1151
        %v1155 = vld [vmem:[#allocation8 + $0x7] sm:$0x1]
        %v1156 = vlaneseq
        %v1157 = vshrl.u32 %v1156, 7
        %v1158 = vsub.s32 0, %v1157
        %v1159 = vrot.slane %v1155, %v1158
        %v1160 = vadd.f32 %v1154, %v1159
        %v1161 = vld [vmem:[#allocation8 + $0x2] sm:$0x1]
        %v1162 = vld [vmem:[#allocation8 + $0x3] sm:$0x1]
        %v1163 = vsel %vm287, %v1160, 0.0
        %1164 = vadd.xlane.f32.xlu0 %v1163
        %v1165 = vpop.xlane.xlu0 %1164
        %v1166 = vmul.f32 %v1165, %v291
        %v1167 = vsub.f32 %v1160, %v1166
        %v1168 = vmul.f32 %v1167, %v1167
        %v1169 = vsel %vm287, %v1168, 0.0
        %1170 = vadd.xlane.f32.xlu0 %v1169
        %v1171 = vpop.xlane.xlu0 %1170
        %v1172 = vmul.f32 %v1171, %v291
        %v1173 = vadd.f32 %v1172, 1e-05
        %v1174 = vrsqrt.pop %v1173
        %v1175 = vmul.f32 %v1167, %v1174
        %v1176 = vlaneseq
        %v1177 = vshrl.u32 %v1176, 7
        %v1178 = vsub.s32 0, %v1177
        %v1179 = vrot.slane %v1161, %v1178
        %v1180 = vmul.f32 %v1175, %v1179
        %v1181 = vlaneseq
        %v1182 = vshrl.u32 %v1181, 7
        %v1183 = vsub.s32 0, %v1182
        %v1184 = vrot.slane %v1162, %v1183
        %v1185 = vadd.f32 %v1180, %v1184
        %v1186 = vld [vmem:[#allocation7 + $0x10] sm:$0xff]
        %v1187 = vld [vmem:[#allocation7 + $0x48] sm:$0xff]
        %v1188 = vld [vmem:[#allocation7 + $0x80] sm:$0xff]
        %v1189 = vld [vmem:[#allocation7 + $0xb8] sm:$0xff]
        %v1190 = vld [vmem:[#allocation8 + $0x8] sm:$0x1]
        %v1191 = vlaneseq
        %v1192 = vshrl.u32 %v1191, 7
        %v1193 = vsub.s32 0, %v1192
        %v1194 = vrot.slane %v1190, %v1193
        %v1196 = vsel %vm287, %v1185, 0
        %1198 = vmatprep.subr.mxu0 0.0
        %1199 = vmatpush1.msra.mxu0 %v1186
        %1200 = vmatprep.subr.mxu0 0.0
        %1201 = vmatpush1.msra.mxu0 %v1187
        %1202 = vmatprep.subr.mxu0 0.0
        %1203 = vmatpush1.msra.mxu0 %v1188
        %1204 = vmatprep.subr.mxu0 0.0
        %1205 = vmatpush1.msra.mxu0 %v1189
        %1206 = vmatprep.subr.mxu0 0.0
        %1207 = vmatpush1.msra.mxu0 0.0
        %1208 = vmatprep.subr.mxu0 0.0
        %1209 = vmatpush1.msra.mxu0 0.0
        %1210 = vmatprep.subr.mxu0 0.0
        %1211 = vmatpush1.msra.mxu0 0.0
        %1212 = vmatprep.subr.mxu0 0.0
        %1213 = vmatpush1.msra.mxu0 0.0
        %1214 = vmatprep.subr.mxu0 0.0
        %1215 = vmatpush1.msra.mxu0 0.0
        %1216 = vmatprep.subr.mxu0 0.0
        %1217 = vmatpush1.msra.mxu0 0.0
        %1218 = vmatprep.subr.mxu0 0.0
        %1219 = vmatpush1.msra.mxu0 0.0
        %1220 = vmatprep.subr.mxu0 0.0
        %1221 = vmatpush1.msra.mxu0 0.0
        %1222 = vmatprep.subr.mxu0 0.0
        %1223 = vmatpush1.msra.mxu0 0.0
        %1224 = vmatprep.subr.mxu0 0.0
        %1225 = vmatpush1.msra.mxu0 0.0
        %1226 = vmatprep.subr.mxu0 0.0
        %1227 = vmatpush1.msra.mxu0 0.0
        %1228 = vmatprep.subr.mxu0 0.0
        %1229 = vmatpush1.msra.mxu0 0.0
        %1230 = vmatprep.subr.mxu0 0.0
        %1231 = vmatpush1.msra.mxu0 0.0
        %1232 = vmatprep.subr.mxu0 0.0
        %1233 = vmatpush1.msra.mxu0 0.0
        %1234 = vmatprep.subr.mxu0 0.0
        %1235 = vmatpush1.msra.mxu0 0.0
        %1236 = vmatprep.subr.mxu0 0.0
        %1237 = vmatpush1.msra.mxu0 0.0
        %1238 = vmatprep.subr.mxu0 0.0
        %1239 = vmatpush1.msra.mxu0 0.0
        %1240 = vmatprep.subr.mxu0 0.0
        %1241 = vmatpush1.msra.mxu0 0.0
        %1242 = vmatprep.subr.mxu0 0.0
        %1243 = vmatpush1.msra.mxu0 0.0
        %1244 = vmatprep.subr.mxu0 0.0
        %1245 = vmatpush1.msra.mxu0 0.0
        %1246 = vmatprep.subr.mxu0 0.0
        %1247 = vmatpush1.msra.mxu0 0.0
        %1248 = vmatprep.subr.mxu0 0.0
        %1249 = vmatpush1.msra.mxu0 0.0
        %1250 = vmatprep.subr.mxu0 0.0
        %1251 = vmatpush1.msra.mxu0 0.0
        %1252 = vmatprep.subr.mxu0 0.0
        %1253 = vmatpush1.msra.mxu0 0.0
        %1254 = vmatprep.subr.mxu0 0.0
        %1255 = vmatpush1.msra.mxu0 0.0
        %1256 = vmatprep.subr.mxu0 0.0
        %1257 = vmatpush1.msra.mxu0 0.0
        %1258 = vmatprep.subr.mxu0 0.0
        %1259 = vmatpush1.msra.mxu0 0.0
        %1260 = vmatprep.subr.mxu0 0.0
        %1261 = vmatpush1.msra.mxu0 0.0
        %1262 = vmatprep.mubr.f32.mxu0 0.0
        %1263 = vmatmul.mubr.f32.gmra.mrb[0].mxu0 %v1196
        %v1264 = vpop.f32.mrb[0].mxu0
        %v1265 = vadd.f32 %v1194, %v1264
        %v1266 = vpop.f32.mrb[0].mxu0
        %1267 = vdwg.mxu0
        %v1268 = vld [vmem:[#allocation7 + $0x18] sm:$0xff]
        %v1269 = vld [vmem:[#allocation7 + $0x50] sm:$0xff]
        %v1270 = vld [vmem:[#allocation7 + $0x88] sm:$0xff]
        %v1271 = vld [vmem:[#allocation7 + $0xc0] sm:$0xff]
        %v1272 = vld [vmem:[#allocation8 + $0x9] sm:$0x1]
        %v1273 = vlaneseq
        %v1274 = vshrl.u32 %v1273, 7
        %v1275 = vsub.s32 0, %v1274
        %v1276 = vrot.slane %v1272, %v1275
        %v1278 = vsel %vm287, %v283, 0
        %v1281 = vsel %vm287, %v284, 0
        %1283 = vmatprep.subr.mxu0 0.0
        %1284 = vmatpush1.msra.mxu0 %v1268
        %1285 = vmatprep.subr.mxu0 0.0
        %1286 = vmatpush1.msra.mxu0 %v1269
        %1287 = vmatprep.subr.mxu0 0.0
        %1288 = vmatpush1.msra.mxu0 %v1270
        %1289 = vmatprep.subr.mxu0 0.0
        %1290 = vmatpush1.msra.mxu0 %v1271
        %1291 = vmatprep.subr.mxu0 0.0
        %1292 = vmatpush1.msra.mxu0 0.0
        %1293 = vmatprep.subr.mxu0 0.0
        %1294 = vmatpush1.msra.mxu0 0.0
        %1295 = vmatprep.subr.mxu0 0.0
        %1296 = vmatpush1.msra.mxu0 0.0
        %1297 = vmatprep.subr.mxu0 0.0
        %1298 = vmatpush1.msra.mxu0 0.0
        %1299 = vmatprep.subr.mxu0 0.0
        %1300 = vmatpush1.msra.mxu0 0.0
        %1301 = vmatprep.subr.mxu0 0.0
        %1302 = vmatpush1.msra.mxu0 0.0
        %1303 = vmatprep.subr.mxu0 0.0
        %1304 = vmatpush1.msra.mxu0 0.0
        %1305 = vmatprep.subr.mxu0 0.0
        %1306 = vmatpush1.msra.mxu0 0.0
        %1307 = vmatprep.subr.mxu0 0.0
        %1308 = vmatpush1.msra.mxu0 0.0
        %1309 = vmatprep.subr.mxu0 0.0
        %1310 = vmatpush1.msra.mxu0 0.0
        %1311 = vmatprep.subr.mxu0 0.0
        %1312 = vmatpush1.msra.mxu0 0.0
        %1313 = vmatprep.subr.mxu0 0.0
        %1314 = vmatpush1.msra.mxu0 0.0
        %1315 = vmatprep.subr.mxu0 0.0
        %1316 = vmatpush1.msra.mxu0 0.0
        %1317 = vmatprep.subr.mxu0 0.0
        %1318 = vmatpush1.msra.mxu0 0.0
        %1319 = vmatprep.subr.mxu0 0.0
        %1320 = vmatpush1.msra.mxu0 0.0
        %1321 = vmatprep.subr.mxu0 0.0
        %1322 = vmatpush1.msra.mxu0 0.0
        %1323 = vmatprep.subr.mxu0 0.0
        %1324 = vmatpush1.msra.mxu0 0.0
        %1325 = vmatprep.subr.mxu0 0.0
        %1326 = vmatpush1.msra.mxu0 0.0
        %1327 = vmatprep.subr.mxu0 0.0
        %1328 = vmatpush1.msra.mxu0 0.0
        %1329 = vmatprep.subr.mxu0 0.0
        %1330 = vmatpush1.msra.mxu0 0.0
        %1331 = vmatprep.subr.mxu0 0.0
        %1332 = vmatpush1.msra.mxu0 0.0
        %1333 = vmatprep.subr.mxu0 0.0
        %1334 = vmatpush1.msra.mxu0 0.0
        %1335 = vmatprep.subr.mxu0 0.0
        %1336 = vmatpush1.msra.mxu0 0.0
        %1337 = vmatprep.subr.mxu0 0.0
        %1338 = vmatpush1.msra.mxu0 0.0
        %1339 = vmatprep.subr.mxu0 0.0
        %1340 = vmatpush1.msra.mxu0 0.0
        %1341 = vmatprep.subr.mxu0 0.0
        %1342 = vmatpush1.msra.mxu0 0.0
        %1343 = vmatprep.subr.mxu0 0.0
        %1344 = vmatpush1.msra.mxu0 0.0
        %1345 = vmatprep.subr.mxu0 0.0
        %1346 = vmatpush1.msra.mxu0 0.0
        %1347 = vmatprep.mubr.f32.mxu0 0.0
        %1348 = vmatmul.mubr.f32.gmra.mrb[0].mxu0 %v1278
        %v1349 = vpop.f32.mrb[0].mxu0
        %v1350 = vadd.f32 %v1276, %v1349
        %v1351 = vpop.f32.mrb[0].mxu0
        %1352 = vmatprep.mubr.f32.mxu0 0.0
        %1353 = vmatmul.mubr.f32.gmra.mrb[0].mxu0 %v1281
        %v1354 = vpop.f32.mrb[0].mxu0
        %v1355 = vadd.f32 %v1276, %v1354
        %v1356 = vpop.f32.mrb[0].mxu0
        %1357 = vdwg.mxu0
        %v1358 = vld [vmem:[#allocation7 + $0x20] sm:$0xff]
        %v1359 = vld [vmem:[#allocation7 + $0x58] sm:$0xff]
        %v1360 = vld [vmem:[#allocation7 + $0x90] sm:$0xff]
        %v1361 = vld [vmem:[#allocation7 + $0xc8] sm:$0xff]
        %v1363 = vsel %vm407, %v1265, 0
        %v1366 = vsel %vm407, %v1350, 0
        %v1369 = vsel %vm407, %v1355, 0
        %1371 = vmatprep.subr.mxu0 0.0
        %1372 = vmatpush1.xpose.msra.mxu0 %v1366
        %1373 = vmatprep.subr.mxu0 0.0
        %1374 = vmatpush1.xpose.msra.mxu0 %v1369
        %1375 = vmatprep.subr.mxu0 0.0
        %1376 = vmatpush1.xpose.msra.mxu0 0.0
        %1377 = vmatprep.subr.mxu0 0.0
        %1378 = vmatpush1.xpose.msra.mxu0 0.0
        %1379 = vmatprep.subr.mxu0 0.0
        %1380 = vmatpush1.xpose.msra.mxu0 0.0
        %1381 = vmatprep.subr.mxu0 0.0
        %1382 = vmatpush1.xpose.msra.mxu0 0.0
        %1383 = vmatprep.subr.mxu0 0.0
        %1384 = vmatpush1.xpose.msra.mxu0 0.0
        %1385 = vmatprep.subr.mxu0 0.0
        %1386 = vmatpush1.xpose.msra.mxu0 0.0
        %1387 = vmatprep.subr.mxu0 0.0
        %1388 = vmatpush1.xpose.msra.mxu0 0.0
        %1389 = vmatprep.subr.mxu0 0.0
        %1390 = vmatpush1.xpose.msra.mxu0 0.0
        %1391 = vmatprep.subr.mxu0 0.0
        %1392 = vmatpush1.xpose.msra.mxu0 0.0
        %1393 = vmatprep.subr.mxu0 0.0
        %1394 = vmatpush1.xpose.msra.mxu0 0.0
        %1395 = vmatprep.subr.mxu0 0.0
        %1396 = vmatpush1.xpose.msra.mxu0 0.0
        %1397 = vmatprep.subr.mxu0 0.0
        %1398 = vmatpush1.xpose.msra.mxu0 0.0
        %1399 = vmatprep.subr.mxu0 0.0
        %1400 = vmatpush1.xpose.msra.mxu0 0.0
        %1401 = vmatprep.subr.mxu0 0.0
        %1402 = vmatpush1.xpose.msra.mxu0 0.0
        %1403 = vmatprep.subr.mxu0 0.0
        %1404 = vmatpush1.xpose.msra.mxu0 0.0
        %1405 = vmatprep.subr.mxu0 0.0
        %1406 = vmatpush1.xpose.msra.mxu0 0.0
        %1407 = vmatprep.subr.mxu0 0.0
        %1408 = vmatpush1.xpose.msra.mxu0 0.0
        %1409 = vmatprep.subr.mxu0 0.0
        %1410 = vmatpush1.xpose.msra.mxu0 0.0
        %1411 = vmatprep.subr.mxu0 0.0
        %1412 = vmatpush1.xpose.msra.mxu0 0.0
        %1413 = vmatprep.subr.mxu0 0.0
        %1414 = vmatpush1.xpose.msra.mxu0 0.0
        %1415 = vmatprep.subr.mxu0 0.0
        %1416 = vmatpush1.xpose.msra.mxu0 0.0
        %1417 = vmatprep.subr.mxu0 0.0
        %1418 = vmatpush1.xpose.msra.mxu0 0.0
        %1419 = vmatprep.subr.mxu0 0.0
        %1420 = vmatpush1.xpose.msra.mxu0 0.0
        %1421 = vmatprep.subr.mxu0 0.0
        %1422 = vmatpush1.xpose.msra.mxu0 0.0
        %1423 = vmatprep.subr.mxu0 0.0
        %1424 = vmatpush1.xpose.msra.mxu0 0.0
        %1425 = vmatprep.subr.mxu0 0.0
        %1426 = vmatpush1.xpose.msra.mxu0 0.0
        %1427 = vmatprep.subr.mxu0 0.0
        %1428 = vmatpush1.xpose.msra.mxu0 0.0
        %1429 = vmatprep.subr.mxu0 0.0
        %1430 = vmatpush1.xpose.msra.mxu0 0.0
        %1431 = vmatprep.subr.mxu0 0.0
        %1432 = vmatpush1.xpose.msra.mxu0 0.0
        %1433 = vmatprep.subr.mxu0 0.0
        %1434 = vmatpush1.xpose.msra.mxu0 0.0
        %1435 = vmatprep.mubr.f32.mxu0 0.0
        %1436 = vmatmul.mubr.f32.gmra.mrb[0].mxu0 %v1363
        %v1437 = vpop.f32.mrb[0].mxu0
        %v1438 = vadd.f32 0.0, %v1437
        %v1439 = vpop.f32.mrb[0].mxu0
        %1440 = vdwg.mxu0
        %v1441 = vsel %vm1077, %v1438, -inf
        %1442 = vmax.xlane.f32.xlu0 %v1441
        %v1443 = vpop.xlane.xlu0 %1442
        %v1444 = vsub.f32 %v1438, %v1443
        %v1445 = vmul.f32 %v1444, 1.442695
        %v1446 = vpow.pop %v1445
        %v1447 = vsel %vm1077, %v1446, 0.0
        %1448 = vadd.xlane.f32.xlu0 %v1447
        %v1449 = vpop.xlane.xlu0 %1448
        %1450 = vrot.lane.b32.xlu0 %v1350, 96
        %v1451 = vpop.permute.xlu0 %1450
        %1452 = vrot.lane.b32.xlu0 %v1355, 96
        %v1453 = vpop.permute.xlu0 %1452
        %v1457 = vsel %vm1077, %v1446, 0
        %1459 = vmatprep.subr.mxu0 0.0
        %1460 = vmatpush1.msra.mxu0 %v1451
        %1461 = vmatprep.subr.mxu0 0.0
        %1462 = vmatpush1.msra.mxu0 %v1453
        %1463 = vmatprep.subr.mxu0 0.0
        %1464 = vmatpush1.msra.mxu0 0.0
        %1465 = vmatprep.subr.mxu0 0.0
        %1466 = vmatpush1.msra.mxu0 0.0
        %1467 = vmatprep.subr.mxu0 0.0
        %1468 = vmatpush1.msra.mxu0 0.0
        %1469 = vmatprep.subr.mxu0 0.0
        %1470 = vmatpush1.msra.mxu0 0.0
        %1471 = vmatprep.subr.mxu0 0.0
        %1472 = vmatpush1.msra.mxu0 0.0
        %1473 = vmatprep.subr.mxu0 0.0
        %1474 = vmatpush1.msra.mxu0 0.0
        %1475 = vmatprep.subr.mxu0 0.0
        %1476 = vmatpush1.msra.mxu0 0.0
        %1477 = vmatprep.subr.mxu0 0.0
        %1478 = vmatpush1.msra.mxu0 0.0
        %1479 = vmatprep.subr.mxu0 0.0
        %1480 = vmatpush1.msra.mxu0 0.0
        %1481 = vmatprep.subr.mxu0 0.0
        %1482 = vmatpush1.msra.mxu0 0.0
        %1483 = vmatprep.subr.mxu0 0.0
        %1484 = vmatpush1.msra.mxu0 0.0
        %1485 = vmatprep.subr.mxu0 0.0
        %1486 = vmatpush1.msra.mxu0 0.0
        %1487 = vmatprep.subr.mxu0 0.0
        %1488 = vmatpush1.msra.mxu0 0.0
        %1489 = vmatprep.subr.mxu0 0.0
        %1490 = vmatpush1.msra.mxu0 0.0
        %1491 = vmatprep.subr.mxu0 0.0
        %1492 = vmatpush1.msra.mxu0 0.0
        %1493 = vmatprep.subr.mxu0 0.0
        %1494 = vmatpush1.msra.mxu0 0.0
        %1495 = vmatprep.subr.mxu0 0.0
        %1496 = vmatpush1.msra.mxu0 0.0
        %1497 = vmatprep.subr.mxu0 0.0
        %1498 = vmatpush1.msra.mxu0 0.0
        %1499 = vmatprep.subr.mxu0 0.0
        %1500 = vmatpush1.msra.mxu0 0.0
        %1501 = vmatprep.subr.mxu0 0.0
        %1502 = vmatpush1.msra.mxu0 0.0
        %1503 = vmatprep.subr.mxu0 0.0
        %1504 = vmatpush1.msra.mxu0 0.0
        %1505 = vmatprep.subr.mxu0 0.0
        %1506 = vmatpush1.msra.mxu0 0.0
        %1507 = vmatprep.subr.mxu0 0.0
        %1508 = vmatpush1.msra.mxu0 0.0
        %1509 = vmatprep.subr.mxu0 0.0
        %1510 = vmatpush1.msra.mxu0 0.0
        %1511 = vmatprep.subr.mxu0 0.0
        %1512 = vmatpush1.msra.mxu0 0.0
        %1513 = vmatprep.subr.mxu0 0.0
        %1514 = vmatpush1.msra.mxu0 0.0
        %1515 = vmatprep.subr.mxu0 0.0
        %1516 = vmatpush1.msra.mxu0 0.0
        %1517 = vmatprep.subr.mxu0 0.0
        %1518 = vmatpush1.msra.mxu0 0.0
        %1519 = vmatprep.subr.mxu0 0.0
        %1520 = vmatpush1.msra.mxu0 0.0
        %1521 = vmatprep.subr.mxu0 0.0
        %1522 = vmatpush1.msra.mxu0 0.0
        %1523 = vmatprep.mubr.f32.mxu0 0.0
        %1524 = vmatmul.mubr.f32.gmra.mrb[0].mxu0 %v1457
        %v1525 = vpop.f32.mrb[0].mxu0
        %v1526 = vadd.f32 0.0, %v1525
        %v1527 = vpop.f32.mrb[0].mxu0
        %1528 = vdwg.mxu0
        %v1529 = vrcp.pop %v1449
        %v1530 = vmul.f32 %v1526, %v1529
        %1531 = vrot.lane.b32.xlu0 %v1265, 120
        %v1532 = vpop.permute.xlu0 %1531
        %1533 = vrot.lane.b32.xlu0 %v1350, 120
        %v1534 = vpop.permute.xlu0 %1533
        %1535 = vrot.lane.b32.xlu0 %v1355, 120
        %v1536 = vpop.permute.xlu0 %1535
        %v1537 = vsel %vm407, %v1532, 0
        %v1539 = vsel %vm407, %v1534, 0
        %v1541 = vsel %vm407, %v1536, 0
        %1543 = vmatprep.subr.mxu0 0.0
        %1544 = vmatpush1.xpose.msra.mxu0 %v1539
        %1545 = vmatprep.subr.mxu0 0.0
        %1546 = vmatpush1.xpose.msra.mxu0 %v1541
        %1547 = vmatprep.subr.mxu0 0.0
        %1548 = vmatpush1.xpose.msra.mxu0 0.0
        %1549 = vmatprep.subr.mxu0 0.0
        %1550 = vmatpush1.xpose.msra.mxu0 0.0
        %1551 = vmatprep.subr.mxu0 0.0
        %1552 = vmatpush1.xpose.msra.mxu0 0.0
        %1553 = vmatprep.subr.mxu0 0.0
        %1554 = vmatpush1.xpose.msra.mxu0 0.0
        %1555 = vmatprep.subr.mxu0 0.0
        %1556 = vmatpush1.xpose.msra.mxu0 0.0
        %1557 = vmatprep.subr.mxu0 0.0
        %1558 = vmatpush1.xpose.msra.mxu0 0.0
        %1559 = vmatprep.subr.mxu0 0.0
        %1560 = vmatpush1.xpose.msra.mxu0 0.0
        %1561 = vmatprep.subr.mxu0 0.0
        %1562 = vmatpush1.xpose.msra.mxu0 0.0
        %1563 = vmatprep.subr.mxu0 0.0
        %1564 = vmatpush1.xpose.msra.mxu0 0.0
        %1565 = vmatprep.subr.mxu0 0.0
        %1566 = vmatpush1.xpose.msra.mxu0 0.0
        %1567 = vmatprep.subr.mxu0 0.0
        %1568 = vmatpush1.xpose.msra.mxu0 0.0
        %1569 = vmatprep.subr.mxu0 0.0
        %1570 = vmatpush1.xpose.msra.mxu0 0.0
        %1571 = vmatprep.subr.mxu0 0.0
        %1572 = vmatpush1.xpose.msra.mxu0 0.0
        %1573 = vmatprep.subr.mxu0 0.0
        %1574 = vmatpush1.xpose.msra.mxu0 0.0
        %1575 = vmatprep.subr.mxu0 0.0
        %1576 = vmatpush1.xpose.msra.mxu0 0.0
        %1577 = vmatprep.subr.mxu0 0.0
        %1578 = vmatpush1.xpose.msra.mxu0 0.0
        %1579 = vmatprep.subr.mxu0 0.0
        %1580 = vmatpush1.xpose.msra.mxu0 0.0
        %1581 = vmatprep.subr.mxu0 0.0
        %1582 = vmatpush1.xpose.msra.mxu0 0.0
        %1583 = vmatprep.subr.mxu0 0.0
        %1584 = vmatpush1.xpose.msra.mxu0 0.0
        %1585 = vmatprep.subr.mxu0 0.0
        %1586 = vmatpush1.xpose.msra.mxu0 0.0
        %1587 = vmatprep.subr.mxu0 0.0
        %1588 = vmatpush1.xpose.msra.mxu0 0.0
        %1589 = vmatprep.subr.mxu0 0.0
        %1590 = vmatpush1.xpose.msra.mxu0 0.0
        %1591 = vmatprep.subr.mxu0 0.0
        %1592 = vmatpush1.xpose.msra.mxu0 0.0
        %1593 = vmatprep.subr.mxu0 0.0
        %1594 = vmatpush1.xpose.msra.mxu0 0.0
        %1595 = vmatprep.subr.mxu0 0.0
        %1596 = vmatpush1.xpose.msra.mxu0 0.0
        %1597 = vmatprep.subr.mxu0 0.0
        %1598 = vmatpush1.xpose.msra.mxu0 0.0
        %1599 = vmatprep.subr.mxu0 0.0
        %1600 = vmatpush1.xpose.msra.mxu0 0.0
        %1601 = vmatprep.subr.mxu0 0.0
        %1602 = vmatpush1.xpose.msra.mxu0 0.0
        %1603 = vmatprep.subr.mxu0 0.0
        %1604 = vmatpush1.xpose.msra.mxu0 0.0
        %1605 = vmatprep.subr.mxu0 0.0
        %1606 = vmatpush1.xpose.msra.mxu0 0.0
        %1607 = vmatprep.mubr.f32.mxu0 0.0
        %1608 = vmatmul.mubr.f32.gmra.mrb[0].mxu0 %v1537
        %v1609 = vpop.f32.mrb[0].mxu0
        %v1610 = vadd.f32 0.0, %v1609
        %v1611 = vpop.f32.mrb[0].mxu0
        %1612 = vdwg.mxu0
        %v1613 = vsel %vm1077, %v1610, -inf
        %1614 = vmax.xlane.f32.xlu0 %v1613
        %v1615 = vpop.xlane.xlu0 %1614
        %v1616 = vsub.f32 %v1610, %v1615
        %v1617 = vmul.f32 %v1616, 1.442695
        %v1618 = vpow.pop %v1617
        %v1619 = vsel %vm1077, %v1618, 0.0
        %1620 = vadd.xlane.f32.xlu0 %v1619
        %v1621 = vpop.xlane.xlu0 %1620
        %1622 = vrot.lane.b32.xlu0 %v1350, 88
        %v1623 = vpop.permute.xlu0 %1622
        %1624 = vrot.lane.b32.xlu0 %v1355, 88
        %v1625 = vpop.permute.xlu0 %1624
        %v1629 = vsel %vm1077, %v1618, 0
        %1631 = vmatprep.subr.mxu0 0.0
        %1632 = vmatpush1.msra.mxu0 %v1623
        %1633 = vmatprep.subr.mxu0 0.0
        %1634 = vmatpush1.msra.mxu0 %v1625
        %1635 = vmatprep.subr.mxu0 0.0
        %1636 = vmatpush1.msra.mxu0 0.0
        %1637 = vmatprep.subr.mxu0 0.0
        %1638 = vmatpush1.msra.mxu0 0.0
        %1639 = vmatprep.subr.mxu0 0.0
        %1640 = vmatpush1.msra.mxu0 0.0
        %1641 = vmatprep.subr.mxu0 0.0
        %1642 = vmatpush1.msra.mxu0 0.0
        %1643 = vmatprep.subr.mxu0 0.0
        %1644 = vmatpush1.msra.mxu0 0.0
        %1645 = vmatprep.subr.mxu0 0.0
        %1646 = vmatpush1.msra.mxu0 0.0
        %1647 = vmatprep.subr.mxu0 0.0
        %1648 = vmatpush1.msra.mxu0 0.0
        %1649 = vmatprep.subr.mxu0 0.0
        %1650 = vmatpush1.msra.mxu0 0.0
        %1651 = vmatprep.subr.mxu0 0.0
        %1652 = vmatpush1.msra.mxu0 0.0
        %1653 = vmatprep.subr.mxu0 0.0
        %1654 = vmatpush1.msra.mxu0 0.0
        %1655 = vmatprep.subr.mxu0 0.0
        %1656 = vmatpush1.msra.mxu0 0.0
        %1657 = vmatprep.subr.mxu0 0.0
        %1658 = vmatpush1.msra.mxu0 0.0
        %1659 = vmatprep.subr.mxu0 0.0
        %1660 = vmatpush1.msra.mxu0 0.0
        %1661 = vmatprep.subr.mxu0 0.0
        %1662 = vmatpush1.msra.mxu0 0.0
        %1663 = vmatprep.subr.mxu0 0.0
        %1664 = vmatpush1.msra.mxu0 0.0
        %1665 = vmatprep.subr.mxu0 0.0
        %1666 = vmatpush1.msra.mxu0 0.0
        %1667 = vmatprep.subr.mxu0 0.0
        %1668 = vmatpush1.msra.mxu0 0.0
        %1669 = vmatprep.subr.mxu0 0.0
        %1670 = vmatpush1.msra.mxu0 0.0
        %1671 = vmatprep.subr.mxu0 0.0
        %1672 = vmatpush1.msra.mxu0 0.0
        %1673 = vmatprep.subr.mxu0 0.0
        %1674 = vmatpush1.msra.mxu0 0.0
        %1675 = vmatprep.subr.mxu0 0.0
        %1676 = vmatpush1.msra.mxu0 0.0
        %1677 = vmatprep.subr.mxu0 0.0
        %1678 = vmatpush1.msra.mxu0 0.0
        %1679 = vmatprep.subr.mxu0 0.0
        %1680 = vmatpush1.msra.mxu0 0.0
        %1681 = vmatprep.subr.mxu0 0.0
        %1682 = vmatpush1.msra.mxu0 0.0
        %1683 = vmatprep.subr.mxu0 0.0
        %1684 = vmatpush1.msra.mxu0 0.0
        %1685 = vmatprep.subr.mxu0 0.0
        %1686 = vmatpush1.msra.mxu0 0.0
        %1687 = vmatprep.subr.mxu0 0.0
        %1688 = vmatpush1.msra.mxu0 0.0
        %1689 = vmatprep.subr.mxu0 0.0
        %1690 = vmatpush1.msra.mxu0 0.0
        %1691 = vmatprep.subr.mxu0 0.0
        %1692 = vmatpush1.msra.mxu0 0.0
        %1693 = vmatprep.subr.mxu0 0.0
        %1694 = vmatpush1.msra.mxu0 0.0
        %1695 = vmatprep.mubr.f32.mxu0 0.0
        %1696 = vmatmul.mubr.f32.gmra.mrb[0].mxu0 %v1629
        %v1697 = vpop.f32.mrb[0].mxu0
        %v1698 = vadd.f32 0.0, %v1697
        %v1699 = vpop.f32.mrb[0].mxu0
        %1700 = vdwg.mxu0
        %v1701 = vrcp.pop %v1621
        %v1702 = vmul.f32 %v1698, %v1701
        %1703 = vrot.lane.b32.xlu0 %v1265, 112
        %v1704 = vpop.permute.xlu0 %1703
        %1705 = vrot.lane.b32.xlu0 %v1350, 112
        %v1706 = vpop.permute.xlu0 %1705
        %1707 = vrot.lane.b32.xlu0 %v1355, 112
        %v1708 = vpop.permute.xlu0 %1707
        %v1709 = vsel %vm407, %v1704, 0
        %v1711 = vsel %vm407, %v1706, 0
        %v1713 = vsel %vm407, %v1708, 0
        %1715 = vmatprep.subr.mxu0 0.0
        %1716 = vmatpush1.xpose.msra.mxu0 %v1711
        %1717 = vmatprep.subr.mxu0 0.0
        %1718 = vmatpush1.xpose.msra.mxu0 %v1713
        %1719 = vmatprep.subr.mxu0 0.0
        %1720 = vmatpush1.xpose.msra.mxu0 0.0
        %1721 = vmatprep.subr.mxu0 0.0
        %1722 = vmatpush1.xpose.msra.mxu0 0.0
        %1723 = vmatprep.subr.mxu0 0.0
        %1724 = vmatpush1.xpose.msra.mxu0 0.0
        %1725 = vmatprep.subr.mxu0 0.0
        %1726 = vmatpush1.xpose.msra.mxu0 0.0
        %1727 = vmatprep.subr.mxu0 0.0
        %1728 = vmatpush1.xpose.msra.mxu0 0.0
        %1729 = vmatprep.subr.mxu0 0.0
        %1730 = vmatpush1.xpose.msra.mxu0 0.0
        %1731 = vmatprep.subr.mxu0 0.0
        %1732 = vmatpush1.xpose.msra.mxu0 0.0
        %1733 = vmatprep.subr.mxu0 0.0
        %1734 = vmatpush1.xpose.msra.mxu0 0.0
        %1735 = vmatprep.subr.mxu0 0.0
        %1736 = vmatpush1.xpose.msra.mxu0 0.0
        %1737 = vmatprep.subr.mxu0 0.0
        %1738 = vmatpush1.xpose.msra.mxu0 0.0
        %1739 = vmatprep.subr.mxu0 0.0
        %1740 = vmatpush1.xpose.msra.mxu0 0.0
        %1741 = vmatprep.subr.mxu0 0.0
        %1742 = vmatpush1.xpose.msra.mxu0 0.0
        %1743 = vmatprep.subr.mxu0 0.0
        %1744 = vmatpush1.xpose.msra.mxu0 0.0
        %1745 = vmatprep.subr.mxu0 0.0
        %1746 = vmatpush1.xpose.msra.mxu0 0.0
        %1747 = vmatprep.subr.mxu0 0.0
        %1748 = vmatpush1.xpose.msra.mxu0 0.0
        %1749 = vmatprep.subr.mxu0 0.0
        %1750 = vmatpush1.xpose.msra.mxu0 0.0
        %1751 = vmatprep.subr.mxu0 0.0
        %1752 = vmatpush1.xpose.msra.mxu0 0.0
        %1753 = vmatprep.subr.mxu0 0.0
        %1754 = vmatpush1.xpose.msra.mxu0 0.0
        %1755 = vmatprep.subr.mxu0 0.0
        %1756 = vmatpush1.xpose.msra.mxu0 0.0
        %1757 = vmatprep.subr.mxu0 0.0
        %1758 = vmatpush1.xpose.msra.mxu0 0.0
        %1759 = vmatprep.subr.mxu0 0.0
        %1760 = vmatpush1.xpose.msra.mxu0 0.0
        %1761 = vmatprep.subr.mxu0 0.0
        %1762 = vmatpush1.xpose.msra.mxu0 0.0
        %1763 = vmatprep.subr.mxu0 0.0
        %1764 = vmatpush1.xpose.msra.mxu0 0.0
        %1765 = vmatprep.subr.mxu0 0.0
        %1766 = vmatpush1.xpose.msra.mxu0 0.0
        %1767 = vmatprep.subr.mxu0 0.0
        %1768 = vmatpush1.xpose.msra.mxu0 0.0
        %1769 = vmatprep.subr.mxu0 0.0
        %1770 = vmatpush1.xpose.msra.mxu0 0.0
        %1771 = vmatprep.subr.mxu0 0.0
        %1772 = vmatpush1.xpose.msra.mxu0 0.0
        %1773 = vmatprep.subr.mxu0 0.0
        %1774 = vmatpush1.xpose.msra.mxu0 0.0
        %1775 = vmatprep.subr.mxu0 0.0
        %1776 = vmatpush1.xpose.msra.mxu0 0.0
        %1777 = vmatprep.subr.mxu0 0.0
        %1778 = vmatpush1.xpose.msra.mxu0 0.0
        %1779 = vmatprep.mubr.f32.mxu0 0.0
        %1780 = vmatmul.mubr.f32.gmra.mrb[0].mxu0 %v1709
        %v1781 = vpop.f32.mrb[0].mxu0
        %v1782 = vadd.f32 0.0, %v1781
        %v1783 = vpop.f32.mrb[0].mxu0
        %1784 = vdwg.mxu0
        %v1785 = vsel %vm1077, %v1782, -inf
        %1786 = vmax.xlane.f32.xlu0 %v1785
        %v1787 = vpop.xlane.xlu0 %1786
        %v1788 = vsub.f32 %v1782, %v1787
        %v1789 = vmul.f32 %v1788, 1.442695
        %v1790 = vpow.pop %v1789
        %v1791 = vsel %vm1077, %v1790, 0.0
        %1792 = vadd.xlane.f32.xlu0 %v1791
        %v1793 = vpop.xlane.xlu0 %1792
        %1794 = vrot.lane.b32.xlu0 %v1350, 80
        %v1795 = vpop.permute.xlu0 %1794
        %1796 = vrot.lane.b32.xlu0 %v1355, 80
        %v1797 = vpop.permute.xlu0 %1796
        %v1801 = vsel %vm1077, %v1790, 0
        %1803 = vmatprep.subr.mxu0 0.0
        %1804 = vmatpush1.msra.mxu0 %v1795
        %1805 = vmatprep.subr.mxu0 0.0
        %1806 = vmatpush1.msra.mxu0 %v1797
        %1807 = vmatprep.subr.mxu0 0.0
        %1808 = vmatpush1.msra.mxu0 0.0
        %1809 = vmatprep.subr.mxu0 0.0
        %1810 = vmatpush1.msra.mxu0 0.0
        %1811 = vmatprep.subr.mxu0 0.0
        %1812 = vmatpush1.msra.mxu0 0.0
        %1813 = vmatprep.subr.mxu0 0.0
        %1814 = vmatpush1.msra.mxu0 0.0
        %1815 = vmatprep.subr.mxu0 0.0
        %1816 = vmatpush1.msra.mxu0 0.0
        %1817 = vmatprep.subr.mxu0 0.0
        %1818 = vmatpush1.msra.mxu0 0.0
        %1819 = vmatprep.subr.mxu0 0.0
        %1820 = vmatpush1.msra.mxu0 0.0
        %1821 = vmatprep.subr.mxu0 0.0
        %1822 = vmatpush1.msra.mxu0 0.0
        %1823 = vmatprep.subr.mxu0 0.0
        %1824 = vmatpush1.msra.mxu0 0.0
        %1825 = vmatprep.subr.mxu0 0.0
        %1826 = vmatpush1.msra.mxu0 0.0
        %1827 = vmatprep.subr.mxu0 0.0
        %1828 = vmatpush1.msra.mxu0 0.0
        %1829 = vmatprep.subr.mxu0 0.0
        %1830 = vmatpush1.msra.mxu0 0.0
        %1831 = vmatprep.subr.mxu0 0.0
        %1832 = vmatpush1.msra.mxu0 0.0
        %1833 = vmatprep.subr.mxu0 0.0
        %1834 = vmatpush1.msra.mxu0 0.0
        %1835 = vmatprep.subr.mxu0 0.0
        %1836 = vmatpush1.msra.mxu0 0.0
        %1837 = vmatprep.subr.mxu0 0.0
        %1838 = vmatpush1.msra.mxu0 0.0
        %1839 = vmatprep.subr.mxu0 0.0
        %1840 = vmatpush1.msra.mxu0 0.0
        %1841 = vmatprep.subr.mxu0 0.0
        %1842 = vmatpush1.msra.mxu0 0.0
        %1843 = vmatprep.subr.mxu0 0.0
        %1844 = vmatpush1.msra.mxu0 0.0
        %1845 = vmatprep.subr.mxu0 0.0
        %1846 = vmatpush1.msra.mxu0 0.0
        %1847 = vmatprep.subr.mxu0 0.0
        %1848 = vmatpush1.msra.mxu0 0.0
        %1849 = vmatprep.subr.mxu0 0.0
        %1850 = vmatpush1.msra.mxu0 0.0
        %1851 = vmatprep.subr.mxu0 0.0
        %1852 = vmatpush1.msra.mxu0 0.0
        %1853 = vmatprep.subr.mxu0 0.0
        %1854 = vmatpush1.msra.mxu0 0.0
        %1855 = vmatprep.subr.mxu0 0.0
        %1856 = vmatpush1.msra.mxu0 0.0
        %1857 = vmatprep.subr.mxu0 0.0
        %1858 = vmatpush1.msra.mxu0 0.0
        %1859 = vmatprep.subr.mxu0 0.0
        %1860 = vmatpush1.msra.mxu0 0.0
        %1861 = vmatprep.subr.mxu0 0.0
        %1862 = vmatpush1.msra.mxu0 0.0
        %1863 = vmatprep.subr.mxu0 0.0
        %1864 = vmatpush1.msra.mxu0 0.0
        %1865 = vmatprep.subr.mxu0 0.0
        %1866 = vmatpush1.msra.mxu0 0.0
        %1867 = vmatprep.mubr.f32.mxu0 0.0
        %1868 = vmatmul.mubr.f32.gmra.mrb[0].mxu0 %v1801
        %v1869 = vpop.f32.mrb[0].mxu0
        %v1870 = vadd.f32 0.0, %v1869
        %v1871 = vpop.f32.mrb[0].mxu0
        %1872 = vdwg.mxu0
        %v1873 = vrcp.pop %v1793
        %v1874 = vmul.f32 %v1870, %v1873
        %1875 = vrot.lane.b32.xlu0 %v1265, 104
        %v1876 = vpop.permute.xlu0 %1875
        %1877 = vrot.lane.b32.xlu0 %v1350, 104
        %v1878 = vpop.permute.xlu0 %1877
        %1879 = vrot.lane.b32.xlu0 %v1355, 104
        %v1880 = vpop.permute.xlu0 %1879
        %v1881 = vsel %vm407, %v1876, 0
        %v1883 = vsel %vm407, %v1878, 0
        %v1885 = vsel %vm407, %v1880, 0
        %1887 = vmatprep.subr.mxu0 0.0
        %1888 = vmatpush1.xpose.msra.mxu0 %v1883
        %1889 = vmatprep.subr.mxu0 0.0
        %1890 = vmatpush1.xpose.msra.mxu0 %v1885
        %1891 = vmatprep.subr.mxu0 0.0
        %1892 = vmatpush1.xpose.msra.mxu0 0.0
        %1893 = vmatprep.subr.mxu0 0.0
        %1894 = vmatpush1.xpose.msra.mxu0 0.0
        %1895 = vmatprep.subr.mxu0 0.0
        %1896 = vmatpush1.xpose.msra.mxu0 0.0
        %1897 = vmatprep.subr.mxu0 0.0
        %1898 = vmatpush1.xpose.msra.mxu0 0.0
        %1899 = vmatprep.subr.mxu0 0.0
        %1900 = vmatpush1.xpose.msra.mxu0 0.0
        %1901 = vmatprep.subr.mxu0 0.0
        %1902 = vmatpush1.xpose.msra.mxu0 0.0
        %1903 = vmatprep.subr.mxu0 0.0
        %1904 = vmatpush1.xpose.msra.mxu0 0.0
        %1905 = vmatprep.subr.mxu0 0.0
        %1906 = vmatpush1.xpose.msra.mxu0 0.0
        %1907 = vmatprep.subr.mxu0 0.0
        %1908 = vmatpush1.xpose.msra.mxu0 0.0
        %1909 = vmatprep.subr.mxu0 0.0
        %1910 = vmatpush1.xpose.msra.mxu0 0.0
        %1911 = vmatprep.subr.mxu0 0.0
        %1912 = vmatpush1.xpose.msra.mxu0 0.0
        %1913 = vmatprep.subr.mxu0 0.0
        %1914 = vmatpush1.xpose.msra.mxu0 0.0
        %1915 = vmatprep.subr.mxu0 0.0
        %1916 = vmatpush1.xpose.msra.mxu0 0.0
        %1917 = vmatprep.subr.mxu0 0.0
        %1918 = vmatpush1.xpose.msra.mxu0 0.0
        %1919 = vmatprep.subr.mxu0 0.0
        %1920 = vmatpush1.xpose.msra.mxu0 0.0
        %1921 = vmatprep.subr.mxu0 0.0
        %1922 = vmatpush1.xpose.msra.mxu0 0.0
        %1923 = vmatprep.subr.mxu0 0.0
        %1924 = vmatpush1.xpose.msra.mxu0 0.0
        %1925 = vmatprep.subr.mxu0 0.0
        %1926 = vmatpush1.xpose.msra.mxu0 0.0
        %1927 = vmatprep.subr.mxu0 0.0
        %1928 = vmatpush1.xpose.msra.mxu0 0.0
        %1929 = vmatprep.subr.mxu0 0.0
        %1930 = vmatpush1.xpose.msra.mxu0 0.0
        %1931 = vmatprep.subr.mxu0 0.0
        %1932 = vmatpush1.xpose.msra.mxu0 0.0
        %1933 = vmatprep.subr.mxu0 0.0
        %1934 = vmatpush1.xpose.msra.mxu0 0.0
        %1935 = vmatprep.subr.mxu0 0.0
        %1936 = vmatpush1.xpose.msra.mxu0 0.0
        %1937 = vmatprep.subr.mxu0 0.0
        %1938 = vmatpush1.xpose.msra.mxu0 0.0
        %1939 = vmatprep.subr.mxu0 0.0
        %1940 = vmatpush1.xpose.msra.mxu0 0.0
        %1941 = vmatprep.subr.mxu0 0.0
        %1942 = vmatpush1.xpose.msra.mxu0 0.0
        %1943 = vmatprep.subr.mxu0 0.0
        %1944 = vmatpush1.xpose.msra.mxu0 0.0
        %1945 = vmatprep.subr.mxu0 0.0
        %1946 = vmatpush1.xpose.msra.mxu0 0.0
        %1947 = vmatprep.subr.mxu0 0.0
        %1948 = vmatpush1.xpose.msra.mxu0 0.0
        %1949 = vmatprep.subr.mxu0 0.0
        %1950 = vmatpush1.xpose.msra.mxu0 0.0
        %1951 = vmatprep.mubr.f32.mxu0 0.0
        %1952 = vmatmul.mubr.f32.gmra.mrb[0].mxu0 %v1881
        %v1953 = vpop.f32.mrb[0].mxu0
        %v1954 = vadd.f32 0.0, %v1953
        %v1955 = vpop.f32.mrb[0].mxu0
        %1956 = vdwg.mxu0
        %v1957 = vsel %vm1077, %v1954, -inf
        %1958 = vmax.xlane.f32.xlu0 %v1957
        %v1959 = vpop.xlane.xlu0 %1958
        %v1960 = vsub.f32 %v1954, %v1959
        %v1961 = vmul.f32 %v1960, 1.442695
        %v1962 = vpow.pop %v1961
        %v1963 = vsel %vm1077, %v1962, 0.0
        %1964 = vadd.xlane.f32.xlu0 %v1963
        %v1965 = vpop.xlane.xlu0 %1964
        %1966 = vrot.lane.b32.xlu0 %v1350, 72
        %v1967 = vpop.permute.xlu0 %1966
        %1968 = vrot.lane.b32.xlu0 %v1355, 72
        %v1969 = vpop.permute.xlu0 %1968
        %v1973 = vsel %vm1077, %v1962, 0
        %1975 = vmatprep.subr.mxu0 0.0
        %1976 = vmatpush1.msra.mxu0 %v1967
        %1977 = vmatprep.subr.mxu0 0.0
        %1978 = vmatpush1.msra.mxu0 %v1969
        %1979 = vmatprep.subr.mxu0 0.0
        %1980 = vmatpush1.msra.mxu0 0.0
        %1981 = vmatprep.subr.mxu0 0.0
        %1982 = vmatpush1.msra.mxu0 0.0
        %1983 = vmatprep.subr.mxu0 0.0
        %1984 = vmatpush1.msra.mxu0 0.0
        %1985 = vmatprep.subr.mxu0 0.0
        %1986 = vmatpush1.msra.mxu0 0.0
        %1987 = vmatprep.subr.mxu0 0.0
        %1988 = vmatpush1.msra.mxu0 0.0
        %1989 = vmatprep.subr.mxu0 0.0
        %1990 = vmatpush1.msra.mxu0 0.0
        %1991 = vmatprep.subr.mxu0 0.0
        %1992 = vmatpush1.msra.mxu0 0.0
        %1993 = vmatprep.subr.mxu0 0.0
        %1994 = vmatpush1.msra.mxu0 0.0
        %1995 = vmatprep.subr.mxu0 0.0
        %1996 = vmatpush1.msra.mxu0 0.0
        %1997 = vmatprep.subr.mxu0 0.0
        %1998 = vmatpush1.msra.mxu0 0.0
        %1999 = vmatprep.subr.mxu0 0.0
        %2000 = vmatpush1.msra.mxu0 0.0
        %2001 = vmatprep.subr.mxu0 0.0
        %2002 = vmatpush1.msra.mxu0 0.0
        %2003 = vmatprep.subr.mxu0 0.0
        %2004 = vmatpush1.msra.mxu0 0.0
        %2005 = vmatprep.subr.mxu0 0.0
        %2006 = vmatpush1.msra.mxu0 0.0
        %2007 = vmatprep.subr.mxu0 0.0
        %2008 = vmatpush1.msra.mxu0 0.0
        %2009 = vmatprep.subr.mxu0 0.0
        %2010 = vmatpush1.msra.mxu0 0.0
        %2011 = vmatprep.subr.mxu0 0.0
        %2012 = vmatpush1.msra.mxu0 0.0
        %2013 = vmatprep.subr.mxu0 0.0
        %2014 = vmatpush1.msra.mxu0 0.0
        %2015 = vmatprep.subr.mxu0 0.0
        %2016 = vmatpush1.msra.mxu0 0.0
        %2017 = vmatprep.subr.mxu0 0.0
        %2018 = vmatpush1.msra.mxu0 0.0
        %2019 = vmatprep.subr.mxu0 0.0
        %2020 = vmatpush1.msra.mxu0 0.0
        %2021 = vmatprep.subr.mxu0 0.0
        %2022 = vmatpush1.msra.mxu0 0.0
        %2023 = vmatprep.subr.mxu0 0.0
        %2024 = vmatpush1.msra.mxu0 0.0
        %2025 = vmatprep.subr.mxu0 0.0
        %2026 = vmatpush1.msra.mxu0 0.0
        %2027 = vmatprep.subr.mxu0 0.0
        %2028 = vmatpush1.msra.mxu0 0.0
        %2029 = vmatprep.subr.mxu0 0.0
        %2030 = vmatpush1.msra.mxu0 0.0
        %2031 = vmatprep.subr.mxu0 0.0
        %2032 = vmatpush1.msra.mxu0 0.0
        %2033 = vmatprep.subr.mxu0 0.0
        %2034 = vmatpush1.msra.mxu0 0.0
        %2035 = vmatprep.subr.mxu0 0.0
        %2036 = vmatpush1.msra.mxu0 0.0
        %2037 = vmatprep.subr.mxu0 0.0
        %2038 = vmatpush1.msra.mxu0 0.0
        %2039 = vmatprep.mubr.f32.mxu0 0.0
        %2040 = vmatmul.mubr.f32.gmra.mrb[0].mxu0 %v1973
        %v2041 = vpop.f32.mrb[0].mxu0
        %v2042 = vadd.f32 0.0, %v2041
        %v2043 = vpop.f32.mrb[0].mxu0
        %2044 = vdwg.mxu0
        %v2045 = vrcp.pop %v1965
        %v2046 = vmul.f32 %v2042, %v2045
        %2048 = vrot.lane.b32.xlu0 %v1702, 8
        %v2049 = vpop.permute.xlu0 %2048
        %2052 = vrot.lane.b32.xlu0 %v1874, 16
        %v2053 = vpop.permute.xlu0 %2052
        %2056 = vrot.lane.b32.xlu0 %v2046, 24
        %v2057 = vpop.permute.xlu0 %2056
        %v2059 = vsel %vm407, %v1530, %v2049
        %v2060 = vsel %vm1077, %v2059, %v2053
        %v2061 = vsel %vm1079, %v2060, %v2057
        %v2063 = vsel %vm287, %v2061, 0
        %2065 = vmatprep.subr.mxu0 0.0
        %2066 = vmatpush1.msra.mxu0 %v1358
        %2067 = vmatprep.subr.mxu0 0.0
        %2068 = vmatpush1.msra.mxu0 %v1359
        %2069 = vmatprep.subr.mxu0 0.0
        %2070 = vmatpush1.msra.mxu0 %v1360
        %2071 = vmatprep.subr.mxu0 0.0
        %2072 = vmatpush1.msra.mxu0 %v1361
        %2073 = vmatprep.subr.mxu0 0.0
        %2074 = vmatpush1.msra.mxu0 0.0
        %2075 = vmatprep.subr.mxu0 0.0
        %2076 = vmatpush1.msra.mxu0 0.0
        %2077 = vmatprep.subr.mxu0 0.0
        %2078 = vmatpush1.msra.mxu0 0.0
        %2079 = vmatprep.subr.mxu0 0.0
        %2080 = vmatpush1.msra.mxu0 0.0
        %2081 = vmatprep.subr.mxu0 0.0
        %2082 = vmatpush1.msra.mxu0 0.0
        %2083 = vmatprep.subr.mxu0 0.0
        %2084 = vmatpush1.msra.mxu0 0.0
        %2085 = vmatprep.subr.mxu0 0.0
        %2086 = vmatpush1.msra.mxu0 0.0
        %2087 = vmatprep.subr.mxu0 0.0
        %2088 = vmatpush1.msra.mxu0 0.0
        %2089 = vmatprep.subr.mxu0 0.0
        %2090 = vmatpush1.msra.mxu0 0.0
        %2091 = vmatprep.subr.mxu0 0.0
        %2092 = vmatpush1.msra.mxu0 0.0
        %2093 = vmatprep.subr.mxu0 0.0
        %2094 = vmatpush1.msra.mxu0 0.0
        %2095 = vmatprep.subr.mxu0 0.0
        %2096 = vmatpush1.msra.mxu0 0.0
        %2097 = vmatprep.subr.mxu0 0.0
        %2098 = vmatpush1.msra.mxu0 0.0
        %2099 = vmatprep.subr.mxu0 0.0
        %2100 = vmatpush1.msra.mxu0 0.0
        %2101 = vmatprep.subr.mxu0 0.0
        %2102 = vmatpush1.msra.mxu0 0.0
        %2103 = vmatprep.subr.mxu0 0.0
        %2104 = vmatpush1.msra.mxu0 0.0
        %2105 = vmatprep.subr.mxu0 0.0
        %2106 = vmatpush1.msra.mxu0 0.0
        %2107 = vmatprep.subr.mxu0 0.0
        %2108 = vmatpush1.msra.mxu0 0.0
        %2109 = vmatprep.subr.mxu0 0.0
        %2110 = vmatpush1.msra.mxu0 0.0
        %2111 = vmatprep.subr.mxu0 0.0
        %2112 = vmatpush1.msra.mxu0 0.0
        %2113 = vmatprep.subr.mxu0 0.0
        %2114 = vmatpush1.msra.mxu0 0.0
        %2115 = vmatprep.subr.mxu0 0.0
        %2116 = vmatpush1.msra.mxu0 0.0
        %2117 = vmatprep.subr.mxu0 0.0
        %2118 = vmatpush1.msra.mxu0 0.0
        %2119 = vmatprep.subr.mxu0 0.0
        %2120 = vmatpush1.msra.mxu0 0.0
        %2121 = vmatprep.subr.mxu0 0.0
        %2122 = vmatpush1.msra.mxu0 0.0
        %2123 = vmatprep.subr.mxu0 0.0
        %2124 = vmatpush1.msra.mxu0 0.0
        %2125 = vmatprep.subr.mxu0 0.0
        %2126 = vmatpush1.msra.mxu0 0.0
        %2127 = vmatprep.subr.mxu0 0.0
        %2128 = vmatpush1.msra.mxu0 0.0
        %2129 = vmatprep.mubr.f32.mxu0 0.0
        %2130 = vmatmul.mubr.f32.gmra.mrb[0].mxu0 %v2063
        %v2131 = vpop.f32.mrb[0].mxu0
        %v2132 = vadd.f32 0.0, %v2131
        %v2133 = vpop.f32.mrb[0].mxu0
        %2134 = vdwg.mxu0
        %v2135 = vadd.f32 %v1160, %v2132
        %v2136 = vld [vmem:[#allocation8 + $0xa] sm:$0x1]
        %v2137 = vlaneseq
        %v2138 = vshrl.u32 %v2137, 7
        %v2139 = vsub.s32 0, %v2138
        %v2140 = vrot.slane %v2136, %v2139
        %v2141 = vadd.f32 %v2135, %v2140
        %v2142 = vld [vmem:[#allocation8 + $0x4] sm:$0x1]
        %v2143 = vld [vmem:[#allocation8 + $0x5] sm:$0x1]
        %v2144 = vsel %vm287, %v2141, 0.0
        %2145 = vadd.xlane.f32.xlu0 %v2144
        %v2146 = vpop.xlane.xlu0 %2145
        %v2147 = vmul.f32 %v2146, %v291
        %v2148 = vsub.f32 %v2141, %v2147
        %v2149 = vmul.f32 %v2148, %v2148
        %v2150 = vsel %vm287, %v2149, 0.0
        %2151 = vadd.xlane.f32.xlu0 %v2150
        %v2152 = vpop.xlane.xlu0 %2151
        %v2153 = vmul.f32 %v2152, %v291
        %v2154 = vadd.f32 %v2153, 1e-05
        %v2155 = vrsqrt.pop %v2154
        %v2156 = vmul.f32 %v2148, %v2155
        %v2157 = vlaneseq
        %v2158 = vshrl.u32 %v2157, 7
        %v2159 = vsub.s32 0, %v2158
        %v2160 = vrot.slane %v2142, %v2159
        %v2161 = vmul.f32 %v2156, %v2160
        %v2162 = vlaneseq
        %v2163 = vshrl.u32 %v2162, 7
        %v2164 = vsub.s32 0, %v2163
        %v2165 = vrot.slane %v2143, %v2164
        %v2166 = vadd.f32 %v2161, %v2165
        %v2167 = vld [vmem:[#allocation7 + $0x28] sm:$0xff]
        %v2168 = vld [vmem:[#allocation7 + $0x60] sm:$0xff]
        %v2169 = vld [vmem:[#allocation7 + $0x98] sm:$0xff]
        %v2170 = vld [vmem:[#allocation7 + $0xd0] sm:$0xff]
        %v2171 = vld [vmem:[#allocation8 + $0xb] sm:$0x1]
        %v2172 = vlaneseq
        %v2173 = vshrl.u32 %v2172, 7
        %v2174 = vsub.s32 0, %v2173
        %v2175 = vrot.slane %v2171, %v2174
        %v2177 = vsel %vm287, %v2166, 0
        %2179 = vmatprep.subr.mxu0 0.0
        %2180 = vmatpush1.msra.mxu0 %v2167
        %2181 = vmatprep.subr.mxu0 0.0
        %2182 = vmatpush1.msra.mxu0 %v2168
        %2183 = vmatprep.subr.mxu0 0.0
        %2184 = vmatpush1.msra.mxu0 %v2169
        %2185 = vmatprep.subr.mxu0 0.0
        %2186 = vmatpush1.msra.mxu0 %v2170
        %2187 = vmatprep.subr.mxu0 0.0
        %2188 = vmatpush1.msra.mxu0 0.0
        %2189 = vmatprep.subr.mxu0 0.0
        %2190 = vmatpush1.msra.mxu0 0.0
        %2191 = vmatprep.subr.mxu0 0.0
        %2192 = vmatpush1.msra.mxu0 0.0
        %2193 = vmatprep.subr.mxu0 0.0
        %2194 = vmatpush1.msra.mxu0 0.0
        %2195 = vmatprep.subr.mxu0 0.0
        %2196 = vmatpush1.msra.mxu0 0.0
        %2197 = vmatprep.subr.mxu0 0.0
        %2198 = vmatpush1.msra.mxu0 0.0
        %2199 = vmatprep.subr.mxu0 0.0
        %2200 = vmatpush1.msra.mxu0 0.0
        %2201 = vmatprep.subr.mxu0 0.0
        %2202 = vmatpush1.msra.mxu0 0.0
        %2203 = vmatprep.subr.mxu0 0.0
        %2204 = vmatpush1.msra.mxu0 0.0
        %2205 = vmatprep.subr.mxu0 0.0
        %2206 = vmatpush1.msra.mxu0 0.0
        %2207 = vmatprep.subr.mxu0 0.0
        %2208 = vmatpush1.msra.mxu0 0.0
        %2209 = vmatprep.subr.mxu0 0.0
        %2210 = vmatpush1.msra.mxu0 0.0
        %2211 = vmatprep.subr.mxu0 0.0
        %2212 = vmatpush1.msra.mxu0 0.0
        %2213 = vmatprep.subr.mxu0 0.0
        %2214 = vmatpush1.msra.mxu0 0.0
        %2215 = vmatprep.subr.mxu0 0.0
        %2216 = vmatpush1.msra.mxu0 0.0
        %2217 = vmatprep.subr.mxu0 0.0
        %2218 = vmatpush1.msra.mxu0 0.0
        %2219 = vmatprep.subr.mxu0 0.0
        %2220 = vmatpush1.msra.mxu0 0.0
        %2221 = vmatprep.subr.mxu0 0.0
        %2222 = vmatpush1.msra.mxu0 0.0
        %2223 = vmatprep.subr.mxu0 0.0
        %2224 = vmatpush1.msra.mxu0 0.0
        %2225 = vmatprep.subr.mxu0 0.0
        %2226 = vmatpush1.msra.mxu0 0.0
        %2227 = vmatprep.subr.mxu0 0.0
        %2228 = vmatpush1.msra.mxu0 0.0
        %2229 = vmatprep.subr.mxu0 0.0
        %2230 = vmatpush1.msra.mxu0 0.0
        %2231 = vmatprep.subr.mxu0 0.0
        %2232 = vmatpush1.msra.mxu0 0.0
        %2233 = vmatprep.subr.mxu0 0.0
        %2234 = vmatpush1.msra.mxu0 0.0
        %2235 = vmatprep.subr.mxu0 0.0
        %2236 = vmatpush1.msra.mxu0 0.0
        %2237 = vmatprep.subr.mxu0 0.0
        %2238 = vmatpush1.msra.mxu0 0.0
        %2239 = vmatprep.subr.mxu0 0.0
        %2240 = vmatpush1.msra.mxu0 0.0
        %2241 = vmatprep.subr.mxu0 0.0
        %2242 = vmatpush1.msra.mxu0 0.0
        %2243 = vmatprep.mubr.f32.mxu0 0.0
        %2244 = vmatmul.mubr.f32.gmra.mrb[0].mxu0 %v2177
        %v2245 = vpop.f32.mrb[0].mxu0
        %v2246 = vadd.f32 %v2175, %v2245
        %v2247 = vpop.f32.mrb[0].mxu0
        %2248 = vdwg.mxu0
        %v2249 = vmul.f32 %v2246, 0.5
        %v2250 = vmul.f32 %v2246, 0.70710677
        %v2251 = verf.f32.pop %v2250
        %v2252 = vadd.f32 %v2251, 1.0
        %v2253 = vmul.f32 %v2249, %v2252
        %v2254 = vld [vmem:[#allocation7 + $0x30] sm:$0xff]
        %v2255 = vld [vmem:[#allocation7 + $0x68] sm:$0xff]
        %v2256 = vld [vmem:[#allocation7 + $0xa0] sm:$0xff]
        %v2257 = vld [vmem:[#allocation7 + $0xd8] sm:$0xff]
        %v2258 = vld [vmem:[#allocation8 + $0xc] sm:$0x1]
        %v2259 = vlaneseq
        %v2260 = vshrl.u32 %v2259, 7
        %v2261 = vsub.s32 0, %v2260
        %v2262 = vrot.slane %v2258, %v2261
        %vm2263 = vcmask 523264
        %v2265 = vsel %vm2263, %v2253, 0
        %v2268 = vsel %vm2263, %v2254, 0
        %v2271 = vsel %vm2263, %v2255, 0
        %v2274 = vsel %vm2263, %v2256, 0
        %v2277 = vsel %vm2263, %v2257, 0
        %2279 = vmatprep.subr.mxu0 0.0
        %2280 = vmatpush1.xpose.msra.mxu0 %v2268
        %2281 = vmatprep.subr.mxu0 0.0
        %2282 = vmatpush1.xpose.msra.mxu0 %v2271
        %2283 = vmatprep.subr.mxu0 0.0
        %2284 = vmatpush1.xpose.msra.mxu0 %v2274
        %2285 = vmatprep.subr.mxu0 0.0
        %2286 = vmatpush1.xpose.msra.mxu0 %v2277
        %2287 = vmatprep.subr.mxu0 0.0
        %2288 = vmatpush1.xpose.msra.mxu0 0.0
        %2289 = vmatprep.subr.mxu0 0.0
        %2290 = vmatpush1.xpose.msra.mxu0 0.0
        %2291 = vmatprep.subr.mxu0 0.0
        %2292 = vmatpush1.xpose.msra.mxu0 0.0
        %2293 = vmatprep.subr.mxu0 0.0
        %2294 = vmatpush1.xpose.msra.mxu0 0.0
        %2295 = vmatprep.subr.mxu0 0.0
        %2296 = vmatpush1.xpose.msra.mxu0 0.0
        %2297 = vmatprep.subr.mxu0 0.0
        %2298 = vmatpush1.xpose.msra.mxu0 0.0
        %2299 = vmatprep.subr.mxu0 0.0
        %2300 = vmatpush1.xpose.msra.mxu0 0.0
        %2301 = vmatprep.subr.mxu0 0.0
        %2302 = vmatpush1.xpose.msra.mxu0 0.0
        %2303 = vmatprep.subr.mxu0 0.0
        %2304 = vmatpush1.xpose.msra.mxu0 0.0
        %2305 = vmatprep.subr.mxu0 0.0
        %2306 = vmatpush1.xpose.msra.mxu0 0.0
        %2307 = vmatprep.subr.mxu0 0.0
        %2308 = vmatpush1.xpose.msra.mxu0 0.0
        %2309 = vmatprep.subr.mxu0 0.0
        %2310 = vmatpush1.xpose.msra.mxu0 0.0
        %2311 = vmatprep.subr.mxu0 0.0
        %2312 = vmatpush1.xpose.msra.mxu0 0.0
        %2313 = vmatprep.subr.mxu0 0.0
        %2314 = vmatpush1.xpose.msra.mxu0 0.0
        %2315 = vmatprep.subr.mxu0 0.0
        %2316 = vmatpush1.xpose.msra.mxu0 0.0
        %2317 = vmatprep.subr.mxu0 0.0
        %2318 = vmatpush1.xpose.msra.mxu0 0.0
        %2319 = vmatprep.subr.mxu0 0.0
        %2320 = vmatpush1.xpose.msra.mxu0 0.0
        %2321 = vmatprep.subr.mxu0 0.0
        %2322 = vmatpush1.xpose.msra.mxu0 0.0
        %2323 = vmatprep.subr.mxu0 0.0
        %2324 = vmatpush1.xpose.msra.mxu0 0.0
        %2325 = vmatprep.subr.mxu0 0.0
        %2326 = vmatpush1.xpose.msra.mxu0 0.0
        %2327 = vmatprep.subr.mxu0 0.0
        %2328 = vmatpush1.xpose.msra.mxu0 0.0
        %2329 = vmatprep.subr.mxu0 0.0
        %2330 = vmatpush1.xpose.msra.mxu0 0.0
        %2331 = vmatprep.subr.mxu0 0.0
        %2332 = vmatpush1.xpose.msra.mxu0 0.0
        %2333 = vmatprep.subr.mxu0 0.0
        %2334 = vmatpush1.xpose.msra.mxu0 0.0
        %2335 = vmatprep.subr.mxu0 0.0
        %2336 = vmatpush1.xpose.msra.mxu0 0.0
        %2337 = vmatprep.subr.mxu0 0.0
        %2338 = vmatpush1.xpose.msra.mxu0 0.0
        %2339 = vmatprep.subr.mxu0 0.0
        %2340 = vmatpush1.xpose.msra.mxu0 0.0
        %2341 = vmatprep.subr.mxu0 0.0
        %2342 = vmatpush1.xpose.msra.mxu0 0.0
        %2343 = vmatprep.mubr.f32.mxu0 0.0
        %2344 = vmatmul.mubr.f32.gmra.mrb[0].mxu0 %v2265
        %v2345 = vpop.f32.mrb[0].mxu0
        %v2346 = vadd.f32 %v2262, %v2345
        %v2347 = vpop.f32.mrb[0].mxu0
        %2348 = vdwg.mxu0
        %v2349 = vadd.f32 %v2141, %v2346
        %v2350 = vsel %vm287, %v2349, 0.0
        %2351 = vst [vmem:[%s281] sm:$0xff] %v2350
        %s2352 = sand.u32 %s127, 1
        %s2353 = scalar_lea.sflag [#allocation4], %s2352
        %s2354 = sand.u32 %s127, 1
        %s2355 = smul.addr %s2354, 8
        %s2356 = scalar_lea.vmem [#allocation10], %s2355
        // Predicated region
        $region53: #{whisper_decoder_layer.1} parent=35 // pred_check
          %p2357 = pneg %p137
        $region54: #{whisper_decoder_layer.1} parent=35 // pred_check_branch
          %2359 = sbr.rel (%p2357) target = $region56
        $region55: #{whisper_decoder_layer.1} parent=35 // pred_region
          %s2361 = ssub.s32 128, 128
          %2362 = vsyncadd %s2353, %s2361
          %s2363 = smul.addr %s25, 128
          %s2364 = scalar_lea.hbm %s4, %s2363
          %s2366 = sshll.u32 %s2356, 4
          %s2367 = int_to_ptr.vmem [resolvable:$true] %s2366
          %2369 = dma.vmem_to_hbm [thread:$0]  %s2367, 128, %s2364, %s2353
        $region56: #{whisper_decoder_layer.1} parent=35 // pred_fallthru
          _
      $region36: #{whisper_decoder_layer.1} parent=5 // pred_fallthru
        _
      %p2370 = scmp.le.s32.totalorder 2, %s20
      // Predicated region
      $region57: #{whisper_decoder_layer.1} parent=5 // pred_check
        %p2371 = pneg %p2370
      $region58: #{whisper_decoder_layer.1} parent=5 // pred_check_branch
        %2373 = sbr.rel (%p2371) target = $region60
      $region59: #{whisper_decoder_layer.1} parent=5 // pred_region
        %s2374 = ssub.s32 %s20, 2
        // Predicated region
        $region61: #{whisper_decoder_layer.1} parent=59 // pred_check
          %p2375 = pneg %p143
        $region62: #{whisper_decoder_layer.1} parent=59 // pred_check_branch
          %2377 = sbr.rel (%p2375) target = $region64
        $region63: #{whisper_decoder_layer.1} parent=59 // pred_region
          %s2378 = sand.u32 %s128, 1
          %s2379 = scalar_lea.sflag [#allocation4], %s2378
          %s2380 = sand.u32 %s128, 1
          %s2381 = smul.addr %s2380, 8
          %s2382 = scalar_lea.vmem [#allocation10], %s2381
          %2383 = dma.done %s2379, 128
        $region64: #{whisper_decoder_layer.1} parent=59 // pred_fallthru
          _
      $region60: #{whisper_decoder_layer.1} parent=5 // pred_fallthru
        _
    $region6: #{whisper_decoder_layer.1} parent=1 // loop_footer
      %s24 = sadd.s32 1, %s20
    $region7: #{whisper_decoder_layer.1} parent=1 // loop_footer_branch
      %19 = sbr.rel target = $region3
    $region8: #{whisper_decoder_layer.1} parent=1 // loop_exit
      _
    %2384 = vsyncpa [#allocation3], 1
    %s2385 = scalar_lea.sflag [#allocation3], 1
    %2386 = vsyncpa %s2385, 1
    %2387 = vsyncpa [#allocation6], 1
    %s2388 = scalar_lea.sflag [#allocation6], 1
    %2389 = vsyncpa %s2388, 1
    %2390 = vsyncpa [#allocation9], 1
    %2391 = vsyncpa [#allocation4], 1
    %s2392 = scalar_lea.sflag [#allocation4], 1
    %2393 = vsyncpa %s2392, 1

</llo_original>
